<compile_context>
chip_gen: v7x
topology: tpu7x:2x2x1
jax: 0.10.0
libtpu: 0.0.40
codegen_flags: <defaults>
</compile_context>

<pallas_src>
import functools

import jax
import jax.numpy as jnp
from jax.experimental import pallas as pl
from jax.experimental.pallas import tpu as pltpu

_PAD_L = 8  # left halo pad in the scratch; 8 keeps the interior store sublane-aligned


def _dwsep_kernel(x_ref, wdw_ref, shift1_ref, wpw_ref, shift2_ref, o_ref, xp_ref,
                  *, use_relu6):
    # x_ref:      (BT, H, W, Cin)              bf16 NHWC input tile (unpadded)
    # wdw_ref:    (9, Cin)  f32                depthwise taps, BN1 scale pre-folded
    # shift1_ref: (1, Cin)  f32                folded depthwise-bias + BN1 shift
    # wpw_ref:    (Cin, Coutp) bf16            pointwise weight^T, BN2 scale pre-folded
    # shift2_ref: (1, Coutp) f32               folded pointwise-bias + BN2 shift
    # o_ref:      (BT, H, W, Coutp) f32
    # xp_ref:     (BT, H+2, W+2*_PAD_L, Cin) f32 scratch: in-kernel halo buffer
    BT, H, W, Cin = x_ref.shape
    Coutp = o_ref.shape[-1]

    # ---- in-kernel halo: zero border + sublane-aligned interior store ------------
    xp_ref[...] = jnp.zeros(xp_ref.shape, xp_ref.dtype)
    xp_ref[:, pl.ds(1, H), pl.ds(_PAD_L, W), :] = x_ref[...].astype(xp_ref.dtype)

    # ---- depthwise 3x3: 9 shifted VMEM reads + per-channel FMA (f32 on the VPU) ---
    wdw = wdw_ref[...]                                        # (9, Cin), hoisted once
    acc = jnp.zeros((BT, H, W, Cin), jnp.float32)
    for t in range(9):
        kh, kw = divmod(t, 3)
        xs = xp_ref[:, pl.ds(kh, H), pl.ds(_PAD_L - 1 + kw, W), :]   # (BT, H, W, Cin)
        acc = acc + xs * wdw[t:t + 1, :]
    a = acc + shift1_ref[...]                                 # BN1 + bias (folded)
    a = jnp.maximum(a, 0.0)
    if use_relu6:
        a = jnp.minimum(a, 6.0)

    # ---- pointwise 1x1 + BN2: one bf16 MXU matmul over all BT*H*W rows ------------
    a2 = a.reshape(BT * H * W, Cin).astype(wpw_ref.dtype)
    y = jnp.dot(a2, wpw_ref[...], preferred_element_type=jnp.float32)   # (M, Coutp) f32
    y = y + shift2_ref[...]                                   # BN2 + bias (folded)
    y = jnp.maximum(y, 0.0)
    if use_relu6:
        y = jnp.minimum(y, 6.0)

    o_ref[...] = y.reshape(BT, H, W, Coutp).astype(o_ref.dtype)


def dwsep_forward(x_nchw, params, *, stride=1, use_relu6=True, batch_tile=1,
                  stream_dtype=jnp.bfloat16, matmul_dtype=jnp.bfloat16, eps=1e-5):
    """x_nchw: (B, Cin, H, W) float32  ->  (B, Cout, H, W) float32 (stride=1)."""
    assert stride == 1  # TODO(synk): strided depthwise (stride>1) not implemented here.
    B, Cin, H, W = x_nchw.shape
    Cout = params["pw_w"].shape[0]

    # ---- fold BatchNorm (eval / running stats) into weights & shifts --------------
    s1 = params["bn1_gamma"] / jnp.sqrt(params["bn1_var"] + eps)          # (Cin,)
    wdw = (params["dw_w"].reshape(Cin, 9) * s1[:, None]).T                # (9, Cin)
    shift1 = (params["dw_b"] - params["bn1_mean"]) * s1 + params["bn1_beta"]
    s2 = params["bn2_gamma"] / jnp.sqrt(params["bn2_var"] + eps)          # (Cout,)
    wpw = (params["pw_w"] * s2[:, None]).T                                # (Cin, Cout)
    shift2 = (params["pw_b"] - params["bn2_mean"]) * s2 + params["bn2_beta"]

    # ---- lane-dense output: pad Cout up to a multiple of 128 ----------------------
    Coutp = ((Cout + 127) // 128) * 128
    if Coutp != Cout:
        wpw = jnp.pad(wpw, ((0, 0), (0, Coutp - Cout)))
        shift2 = jnp.pad(shift2, ((0, Coutp - Cout),))

    # ---- channels-last + bf16 streaming; halo handled inside the kernel -----------
    # (If the producer/consumer is another TPU kernel, keep NHWC and skip both transposes.)
    x = jnp.transpose(x_nchw, (0, 2, 3, 1)).astype(stream_dtype)          # (B, H, W, Cin)

    bt = min(batch_tile, B)
    assert B % bt == 0
    grid = (B // bt,)

    # ---- VMEM budget -> explicit scoped limit (v5e default 16 MiB; v7x phys 64 MiB) ---
    in_blk = bt * H * W * Cin * jnp.dtype(stream_dtype).itemsize
    out_blk = bt * H * W * Coutp * 4
    halo = bt * (H + 2) * (W + 2 * _PAD_L) * Cin * 4
    wts = 9 * Cin * 4 + Cin * 4 + Cin * Coutp * jnp.dtype(matmul_dtype).itemsize + Coutp * 4
    live = bt * H * W * (2 * Cin + Coutp) * 4                  # acc/a + y f32 intermediates
    est = 2 * (in_blk + out_blk + wts) + halo + live
    vmem_limit = int(min(48 * 2**20, max(32 * 2**20, 2 * est)))

    kernel = functools.partial(_dwsep_kernel, use_relu6=use_relu6)
    out_nhwc = pl.pallas_call(
        kernel,
        out_shape=jax.ShapeDtypeStruct((B, H, W, Coutp), jnp.float32),
        grid_spec=pltpu.PrefetchScalarGridSpec(
            num_scalar_prefetch=0,
            grid=grid,
            in_specs=[
                pl.BlockSpec((bt, H, W, Cin), lambda i: (i, 0, 0, 0)),
                pl.BlockSpec((9, Cin), lambda i: (0, 0)),
                pl.BlockSpec((1, Cin), lambda i: (0, 0)),
                pl.BlockSpec((Cin, Coutp), lambda i: (0, 0)),
                pl.BlockSpec((1, Coutp), lambda i: (0, 0)),
            ],
            out_specs=pl.BlockSpec((bt, H, W, Coutp), lambda i: (i, 0, 0, 0)),
            scratch_shapes=[pltpu.VMEM((bt, H + 2, W + 2 * _PAD_L, Cin), jnp.float32)],
        ),
        compiler_params=pltpu.CompilerParams(
            dimension_semantics=("parallel",),
            vmem_limit_bytes=vmem_limit,
        ),
    )(
        x,
        wdw.astype(jnp.float32),
        shift1.reshape(1, Cin).astype(jnp.float32),
        wpw.astype(matmul_dtype),
        shift2.reshape(1, Coutp).astype(jnp.float32),
    )

    out_nhwc = out_nhwc[..., :Cout]
    # Back to NCHW to match the PyTorch module's output convention.
    return jnp.transpose(out_nhwc, (0, 3, 1, 2))


def reference_forward(x_nchw, params, *, use_relu6=True, eps=1e-5):
    """Pure-JAX reference (same eval-mode BN semantics as the PyTorch module)."""
    B, Cin, H, W = x_nchw.shape
    x = jnp.transpose(x_nchw, (0, 2, 3, 1)).astype(jnp.float32)
    xp = jnp.pad(x, ((0, 0), (1, 1), (1, 1), (0, 0)))
    acc = jnp.zeros((B, H, W, Cin), jnp.float32)
    for kh in range(3):
        for kw in range(3):
            acc = acc + xp[:, kh:kh + H, kw:kw + W, :] * params["dw_w"][:, kh, kw]
    acc = acc + params["dw_b"]
    a = (acc - params["bn1_mean"]) / jnp.sqrt(params["bn1_var"] + eps)
    a = a * params["bn1_gamma"] + params["bn1_beta"]
    a = jnp.clip(a, 0.0, 6.0) if use_relu6 else jnp.maximum(a, 0.0)
    y = jnp.einsum("bhwc,oc->bhwo", a, params["pw_w"],
                   precision=jax.lax.Precision.HIGHEST) + params["pw_b"]
    y = (y - params["bn2_mean"]) / jnp.sqrt(params["bn2_var"] + eps)
    y = y * params["bn2_gamma"] + params["bn2_beta"]
    y = jnp.clip(y, 0.0, 6.0) if use_relu6 else jnp.maximum(y, 0.0)
    return jnp.transpose(y, (0, 3, 1, 2))


def make_params(key, in_channels, out_channels):
    k = jax.random.split(key, 12)
    return {
        "dw_w": 0.2 * jax.random.normal(k[0], (in_channels, 3, 3), jnp.float32),
        "dw_b": 0.1 * jax.random.normal(k[1], (in_channels,), jnp.float32),
        "bn1_gamma": 1.0 + 0.1 * jax.random.normal(k[2], (in_channels,), jnp.float32),
        "bn1_beta": 0.1 * jax.random.normal(k[3], (in_channels,), jnp.float32),
        "bn1_mean": 0.1 * jax.random.normal(k[4], (in_channels,), jnp.float32),
        "bn1_var": jnp.abs(1.0 + 0.1 * jax.random.normal(k[5], (in_channels,), jnp.float32)),
        "pw_w": 0.1 * jax.random.normal(k[6], (out_channels, in_channels), jnp.float32),
        "pw_b": 0.1 * jax.random.normal(k[7], (out_channels,), jnp.float32),
        "bn2_gamma": 1.0 + 0.1 * jax.random.normal(k[8], (out_channels,), jnp.float32),
        "bn2_beta": 0.1 * jax.random.normal(k[9], (out_channels,), jnp.float32),
        "bn2_mean": 0.1 * jax.random.normal(k[10], (out_channels,), jnp.float32),
        "bn2_var": jnp.abs(1.0 + 0.1 * jax.random.normal(k[11], (out_channels,), jnp.float32)),
    }


if __name__ == "__main__":
    B, Cin, Cout = 2, 64, 128   # Cout multiple of 128 -> lane-dense output stores
    H = W = 16

    key = jax.random.PRNGKey(0)
    kx, kp = jax.random.split(key)
    x = jax.random.normal(kx, (B, Cin, H, W), jnp.float32)
    params = make_params(kp, Cin, Cout)

    # batch_tile=1 -> grid=(2,) parallel steps (v7x dual-TC sharding + DMA/compute overlap)
    fwd = jax.jit(functools.partial(dwsep_forward, stride=1, use_relu6=True, batch_tile=1))
    out = fwd(x, params)
    jax.block_until_ready(out)

    assert out.shape == (B, Cout, H, W), out.shape
    ref = reference_forward(x, params, use_relu6=True)
    max_err = float(jnp.max(jnp.abs(out - ref)))
    # bf16 activation streaming + bf16 MXU matmul vs. f32 HIGHEST reference -> slightly
    # looser tolerance than a pure-f32 kernel.
    assert jnp.allclose(out, ref, rtol=3e-2, atol=3e-2), max_err
    assert bool(jnp.all(out >= 0.0)) and bool(jnp.all(out <= 6.0))  # ReLU6 sanity
    print("KERNEL_OK")
</pallas_src>

<mosaic_0001>
module attributes {stable_mosaic.version = 11 : i64} {
  func.func @_dwsep_kernel(%arg0: i32, %arg1: memref<1x16x16x64xbf16, #tpu.memory_space<vmem>>, %arg2: memref<9x64xf32, #tpu.memory_space<vmem>>, %arg3: memref<1x64xf32, #tpu.memory_space<vmem>>, %arg4: memref<64x128xbf16, #tpu.memory_space<vmem>>, %arg5: memref<1x128xf32, #tpu.memory_space<vmem>>, %arg6: memref<1x16x16x128xf32, #tpu.memory_space<vmem>>, %arg7: memref<1x18x32x64xf32, #tpu.memory_space<vmem>>) attributes {dimension_semantics = [#tpu.dimension_semantics<parallel>], iteration_bounds = array<i64: 2>, scalar_prefetch = 0 : i64, scratch_operands = 1 : i64, tpu.core_type = #tpu.core_type<tc>, window_params = [{transform_indices = @transform_0, window_bounds = array<i64: 1, 16, 16, 64>}, {pipeline_mode = #tpu.pipeline_mode<synchronous>, transform_indices = @transform_1, window_bounds = array<i64: 9, 64>}, {pipeline_mode = #tpu.pipeline_mode<synchronous>, transform_indices = @transform_2, window_bounds = array<i64: 1, 64>}, {pipeline_mode = #tpu.pipeline_mode<synchronous>, transform_indices = @transform_3, window_bounds = array<i64: 64, 128>}, {pipeline_mode = #tpu.pipeline_mode<synchronous>, transform_indices = @transform_4, window_bounds = array<i64: 1, 128>}, {transform_indices = @transform_5, window_bounds = array<i64: 1, 16, 16, 128>}]} {
    %cst = arith.constant 0.000000e+00 : f32
    %0 = vector.broadcast %cst : f32 to vector<1x18x32x64xf32>
    %c0 = arith.constant 0 : index
    %c0_0 = arith.constant 0 : index
    %c0_1 = arith.constant 0 : index
    %c0_2 = arith.constant 0 : index
    %1 = vector.load %arg7[%c0, %c0_0, %c0_1, %c0_2] : memref<1x18x32x64xf32, #tpu.memory_space<vmem>>, vector<1x18x32x64xf32>
    tpu.vector_store %arg7[%c0, %c0_0, %c0_1, %c0_2], %0 {strides = array<i32>} : memref<1x18x32x64xf32, #tpu.memory_space<vmem>>, vector<1x18x32x64xf32>,
    %c0_3 = arith.constant 0 : index
    %c0_4 = arith.constant 0 : index
    %c0_5 = arith.constant 0 : index
    %c0_6 = arith.constant 0 : index
    %2 = vector.load %arg1[%c0_3, %c0_4, %c0_5, %c0_6] : memref<1x16x16x64xbf16, #tpu.memory_space<vmem>>, vector<1x16x16x64xbf16>
    %3 = arith.extf %2 : vector<1x16x16x64xbf16> to vector<1x16x16x64xf32>
    %c0_7 = arith.constant 0 : index
    %c1 = arith.constant 1 : index
    %c8 = arith.constant 8 : index
    %c0_8 = arith.constant 0 : index
    %4 = vector.load %arg7[%c0_7, %c1, %c8, %c0_8] : memref<1x18x32x64xf32, #tpu.memory_space<vmem>>, vector<1x16x16x64xf32>
    tpu.vector_store %arg7[%c0_7, %c1, %c8, %c0_8], %3 {strides = array<i32>} : memref<1x18x32x64xf32, #tpu.memory_space<vmem>>, vector<1x16x16x64xf32>,
    %c0_9 = arith.constant 0 : index
    %c0_10 = arith.constant 0 : index
    %5 = vector.load %arg2[%c0_9, %c0_10] : memref<9x64xf32, #tpu.memory_space<vmem>>, vector<9x64xf32>
    %cst_11 = arith.constant 0.000000e+00 : f32
    %6 = vector.broadcast %cst_11 : f32 to vector<1x16x16x64xf32>
    %c0_12 = arith.constant 0 : index
    %c0_13 = arith.constant 0 : index
    %c7 = arith.constant 7 : index
    %c0_14 = arith.constant 0 : index
    %7 = vector.load %arg7[%c0_12, %c0_13, %c7, %c0_14] : memref<1x18x32x64xf32, #tpu.memory_space<vmem>>, vector<1x16x16x64xf32>
    %8 = vector.extract_strided_slice %5 {offsets = [0, 0], sizes = [1, 64], strides = [1, 1]} : vector<9x64xf32> to vector<1x64xf32>
    %9 = vector.shape_cast %8 : vector<1x64xf32> to vector<1x1x1x64xf32>
    %10 = vector.broadcast %9 : vector<1x1x1x64xf32> to vector<1x16x16x64xf32>
    %11 = arith.mulf %7, %10 : vector<1x16x16x64xf32>
    %12 = arith.addf %6, %11 : vector<1x16x16x64xf32>
    %c0_15 = arith.constant 0 : index
    %c0_16 = arith.constant 0 : index
    %c8_17 = arith.constant 8 : index
    %c0_18 = arith.constant 0 : index
    %13 = vector.load %arg7[%c0_15, %c0_16, %c8_17, %c0_18] : memref<1x18x32x64xf32, #tpu.memory_space<vmem>>, vector<1x16x16x64xf32>
    %14 = vector.extract_strided_slice %5 {offsets = [1, 0], sizes = [1, 64], strides = [1, 1]} : vector<9x64xf32> to vector<1x64xf32>
    %15 = vector.shape_cast %14 : vector<1x64xf32> to vector<1x1x1x64xf32>
    %16 = vector.broadcast %15 : vector<1x1x1x64xf32> to vector<1x16x16x64xf32>
    %17 = arith.mulf %13, %16 : vector<1x16x16x64xf32>
    %18 = arith.addf %12, %17 : vector<1x16x16x64xf32>
    %c0_19 = arith.constant 0 : index
    %c0_20 = arith.constant 0 : index
    %c9 = arith.constant 9 : index
    %c0_21 = arith.constant 0 : index
    %19 = vector.load %arg7[%c0_19, %c0_20, %c9, %c0_21] : memref<1x18x32x64xf32, #tpu.memory_space<vmem>>, vector<1x16x16x64xf32>
    %20 = vector.extract_strided_slice %5 {offsets = [2, 0], sizes = [1, 64], strides = [1, 1]} : vector<9x64xf32> to vector<1x64xf32>
    %21 = vector.shape_cast %20 : vector<1x64xf32> to vector<1x1x1x64xf32>
    %22 = vector.broadcast %21 : vector<1x1x1x64xf32> to vector<1x16x16x64xf32>
    %23 = arith.mulf %19, %22 : vector<1x16x16x64xf32>
    %24 = arith.addf %18, %23 : vector<1x16x16x64xf32>
    %c0_22 = arith.constant 0 : index
    %c1_23 = arith.constant 1 : index
    %c7_24 = arith.constant 7 : index
    %c0_25 = arith.constant 0 : index
    %25 = vector.load %arg7[%c0_22, %c1_23, %c7_24, %c0_25] : memref<1x18x32x64xf32, #tpu.memory_space<vmem>>, vector<1x16x16x64xf32>
    %26 = vector.extract_strided_slice %5 {offsets = [3, 0], sizes = [1, 64], strides = [1, 1]} : vector<9x64xf32> to vector<1x64xf32>
    %27 = vector.shape_cast %26 : vector<1x64xf32> to vector<1x1x1x64xf32>
    %28 = vector.broadcast %27 : vector<1x1x1x64xf32> to vector<1x16x16x64xf32>
    %29 = arith.mulf %25, %28 : vector<1x16x16x64xf32>
    %30 = arith.addf %24, %29 : vector<1x16x16x64xf32>
    %c0_26 = arith.constant 0 : index
    %c1_27 = arith.constant 1 : index
    %c8_28 = arith.constant 8 : index
    %c0_29 = arith.constant 0 : index
    %31 = vector.load %arg7[%c0_26, %c1_27, %c8_28, %c0_29] : memref<1x18x32x64xf32, #tpu.memory_space<vmem>>, vector<1x16x16x64xf32>
    %32 = vector.extract_strided_slice %5 {offsets = [4, 0], sizes = [1, 64], strides = [1, 1]} : vector<9x64xf32> to vector<1x64xf32>
    %33 = vector.shape_cast %32 : vector<1x64xf32> to vector<1x1x1x64xf32>
    %34 = vector.broadcast %33 : vector<1x1x1x64xf32> to vector<1x16x16x64xf32>
    %35 = arith.mulf %31, %34 : vector<1x16x16x64xf32>
    %36 = arith.addf %30, %35 : vector<1x16x16x64xf32>
    %c0_30 = arith.constant 0 : index
    %c1_31 = arith.constant 1 : index
    %c9_32 = arith.constant 9 : index
    %c0_33 = arith.constant 0 : index
    %37 = vector.load %arg7[%c0_30, %c1_31, %c9_32, %c0_33] : memref<1x18x32x64xf32, #tpu.memory_space<vmem>>, vector<1x16x16x64xf32>
    %38 = vector.extract_strided_slice %5 {offsets = [5, 0], sizes = [1, 64], strides = [1, 1]} : vector<9x64xf32> to vector<1x64xf32>
    %39 = vector.shape_cast %38 : vector<1x64xf32> to vector<1x1x1x64xf32>
    %40 = vector.broadcast %39 : vector<1x1x1x64xf32> to vector<1x16x16x64xf32>
    %41 = arith.mulf %37, %40 : vector<1x16x16x64xf32>
    %42 = arith.addf %36, %41 : vector<1x16x16x64xf32>
    %c0_34 = arith.constant 0 : index
    %c2 = arith.constant 2 : index
    %c7_35 = arith.constant 7 : index
    %c0_36 = arith.constant 0 : index
    %43 = vector.load %arg7[%c0_34, %c2, %c7_35, %c0_36] : memref<1x18x32x64xf32, #tpu.memory_space<vmem>>, vector<1x16x16x64xf32>
    %44 = vector.extract_strided_slice %5 {offsets = [6, 0], sizes = [1, 64], strides = [1, 1]} : vector<9x64xf32> to vector<1x64xf32>
    %45 = vector.shape_cast %44 : vector<1x64xf32> to vector<1x1x1x64xf32>
    %46 = vector.broadcast %45 : vector<1x1x1x64xf32> to vector<1x16x16x64xf32>
    %47 = arith.mulf %43, %46 : vector<1x16x16x64xf32>
    %48 = arith.addf %42, %47 : vector<1x16x16x64xf32>
    %c0_37 = arith.constant 0 : index
    %c2_38 = arith.constant 2 : index
    %c8_39 = arith.constant 8 : index
    %c0_40 = arith.constant 0 : index
    %49 = vector.load %arg7[%c0_37, %c2_38, %c8_39, %c0_40] : memref<1x18x32x64xf32, #tpu.memory_space<vmem>>, vector<1x16x16x64xf32>
    %50 = vector.extract_strided_slice %5 {offsets = [7, 0], sizes = [1, 64], strides = [1, 1]} : vector<9x64xf32> to vector<1x64xf32>
    %51 = vector.shape_cast %50 : vector<1x64xf32> to vector<1x1x1x64xf32>
    %52 = vector.broadcast %51 : vector<1x1x1x64xf32> to vector<1x16x16x64xf32>
    %53 = arith.mulf %49, %52 : vector<1x16x16x64xf32>
    %54 = arith.addf %48, %53 : vector<1x16x16x64xf32>
    %c0_41 = arith.constant 0 : index
    %c2_42 = arith.constant 2 : index
    %c9_43 = arith.constant 9 : index
    %c0_44 = arith.constant 0 : index
    %55 = vector.load %arg7[%c0_41, %c2_42, %c9_43, %c0_44] : memref<1x18x32x64xf32, #tpu.memory_space<vmem>>, vector<1x16x16x64xf32>
    %56 = vector.extract_strided_slice %5 {offsets = [8, 0], sizes = [1, 64], strides = [1, 1]} : vector<9x64xf32> to vector<1x64xf32>
    %57 = vector.shape_cast %56 : vector<1x64xf32> to vector<1x1x1x64xf32>
    %58 = vector.broadcast %57 : vector<1x1x1x64xf32> to vector<1x16x16x64xf32>
    %59 = arith.mulf %55, %58 : vector<1x16x16x64xf32>
    %60 = arith.addf %54, %59 : vector<1x16x16x64xf32>
    %c0_45 = arith.constant 0 : index
    %c0_46 = arith.constant 0 : index
    %61 = vector.load %arg3[%c0_45, %c0_46] : memref<1x64xf32, #tpu.memory_space<vmem>>, vector<1x64xf32>
    %62 = vector.shape_cast %61 : vector<1x64xf32> to vector<1x1x1x64xf32>
    %63 = vector.broadcast %62 : vector<1x1x1x64xf32> to vector<1x16x16x64xf32>
    %64 = arith.addf %60, %63 : vector<1x16x16x64xf32>
    %cst_47 = arith.constant 0.000000e+00 : f32
    %65 = vector.broadcast %cst_47 : f32 to vector<1x16x16x64xf32>
    %66 = arith.maximumf %64, %65 : vector<1x16x16x64xf32>
    %cst_48 = arith.constant 6.000000e+00 : f32
    %67 = vector.broadcast %cst_48 : f32 to vector<1x16x16x64xf32>
    %68 = arith.minimumf %66, %67 : vector<1x16x16x64xf32>
    %69 = vector.shape_cast %68 : vector<1x16x16x64xf32> to vector<256x64xf32>
    %70 = arith.truncf %69 : vector<256x64xf32> to vector<256x64xbf16>
    %c0_49 = arith.constant 0 : index
    %c0_50 = arith.constant 0 : index
    %71 = vector.load %arg4[%c0_49, %c0_50] : memref<64x128xbf16, #tpu.memory_space<vmem>>, vector<64x128xbf16>
    %cst_51 = arith.constant dense<0.000000e+00> : vector<256x128xf32>
    %72 = tpu.matmul %70, %71, %cst_51 {dimension_numbers = #tpu.dot_dimension_numbers<[1], [0], [0], [1], [0, 0, 1, 1], [], []>} : vector<256x64xbf16>, vector<64x128xbf16>, vector<256x128xf32> -> vector<256x128xf32>
    %c0_52 = arith.constant 0 : index
    %c0_53 = arith.constant 0 : index
    %73 = vector.load %arg5[%c0_52, %c0_53] : memref<1x128xf32, #tpu.memory_space<vmem>>, vector<1x128xf32>
    %74 = vector.broadcast %73 : vector<1x128xf32> to vector<256x128xf32>
    %75 = arith.addf %72, %74 : vector<256x128xf32>
    %cst_54 = arith.constant 0.000000e+00 : f32
    %76 = vector.broadcast %cst_54 : f32 to vector<256x128xf32>
    %77 = arith.maximumf %75, %76 : vector<256x128xf32>
    %cst_55 = arith.constant 6.000000e+00 : f32
    %78 = vector.broadcast %cst_55 : f32 to vector<256x128xf32>
    %79 = arith.minimumf %77, %78 : vector<256x128xf32>
    %80 = vector.shape_cast %79 : vector<256x128xf32> to vector<1x16x16x128xf32>
    %c0_56 = arith.constant 0 : index
    %c0_57 = arith.constant 0 : index
    %c0_58 = arith.constant 0 : index
    %c0_59 = arith.constant 0 : index
    %81 = vector.load %arg6[%c0_56, %c0_57, %c0_58, %c0_59] : memref<1x16x16x128xf32, #tpu.memory_space<vmem>>, vector<1x16x16x128xf32>
    tpu.vector_store %arg6[%c0_56, %c0_57, %c0_58, %c0_59], %80 {strides = array<i32>} : memref<1x16x16x128xf32, #tpu.memory_space<vmem>>, vector<1x16x16x128xf32>,
    return
  }
  func.func @transform_0(%arg0: i32) -> (i32, i32, i32, i32) {
    %c0_i32 = arith.constant 0 : i32
    %c0_i32_0 = arith.constant 0 : i32
    %c0_i32_1 = arith.constant 0 : i32
    %c0_i32_2 = arith.constant 0 : i32
    return %arg0, %c0_i32, %c0_i32_0, %c0_i32_1 : i32, i32, i32, i32
  }
  func.func @transform_1(%arg0: i32) -> (i32, i32) {
    %c0_i32 = arith.constant 0 : i32
    %c0_i32_0 = arith.constant 0 : i32
    %c0_i32_1 = arith.constant 0 : i32
    return %c0_i32, %c0_i32_0 : i32, i32
  }
  func.func @transform_2(%arg0: i32) -> (i32, i32) {
    %c0_i32 = arith.constant 0 : i32
    %c0_i32_0 = arith.constant 0 : i32
    %c0_i32_1 = arith.constant 0 : i32
    return %c0_i32, %c0_i32_0 : i32, i32
  }
  func.func @transform_3(%arg0: i32) -> (i32, i32) {
    %c0_i32 = arith.constant 0 : i32
    %c0_i32_0 = arith.constant 0 : i32
    %c0_i32_1 = arith.constant 0 : i32
    return %c0_i32, %c0_i32_0 : i32, i32
  }
  func.func @transform_4(%arg0: i32) -> (i32, i32) {
    %c0_i32 = arith.constant 0 : i32
    %c0_i32_0 = arith.constant 0 : i32
    %c0_i32_1 = arith.constant 0 : i32
    return %c0_i32, %c0_i32_0 : i32, i32
  }
  func.func @transform_5(%arg0: i32) -> (i32, i32, i32, i32) {
    %c0_i32 = arith.constant 0 : i32
    %c0_i32_0 = arith.constant 0 : i32
    %c0_i32_1 = arith.constant 0 : i32
    %c0_i32_2 = arith.constant 0 : i32
    return %arg0, %c0_i32, %c0_i32_0, %c0_i32_1 : i32, i32, i32, i32
  }
}

</mosaic_0001>

<llo_original>
// kernel: dwsep_forward.1
$region0: #{dwsep_forward.1}
  #allocation0 [shape = 'u32[]', space=smem, size = 0x4, offset = 0x4, fixed_abs, tag = 'smem constant byte address 0x4 - core index']
  #allocation1 [shape = 'u32[144,128]{1,0:T(1,128)}', space=vmem, size = 0x12000, scoped, tag = 'internal scratch']
  #allocation2 [shape = 'f32[1,18,32,64]{3,2,1,0:T(8,128)}', space=vmem, size = 0x48000, scoped, tag = 'scratch operand']
  %s0 = inlined_call_operand.vmem [shape: bf16[2,16,16,64], index: 0, kind: input, shape index: {}]
  %s1 = inlined_call_operand.vmem [shape: f32[9,64], index: 1, kind: input, shape index: {}]
  %s2 = inlined_call_operand.vmem [shape: f32[1,64], index: 2, kind: input, shape index: {}]
  %s3 = inlined_call_operand.vmem [shape: bf16[64,128], index: 3, kind: input, shape index: {}]
  %s4 = inlined_call_operand.vmem [shape: f32[1,128], index: 4, kind: input, shape index: {}]
  %s5 = inlined_call_operand.hbm [shape: f32[2,16,16,128], index: 5, kind: output, shape index: {}]
  %s6 = sld [smem:[#allocation0]]
  $region53: #{dwsep_forward.1} parent=0
    _
  %s8 = ssub.s32 1, %s6
  %s9 = scalar_select 0, %s8, %s6
  $region1: #{dwsep_forward.1} parent=0
    #allocation3 [shape = 'u8[262144]{0}', space=vmem, size = 0x40000, scoped, tag = 'output window, operand 0']
    #allocation4 [shape = 's32[2]{0}', space=sflag, size = 0x8, scoped, tag = 'scoped memory for dwsep_forward.1']
    %10 = vsyncpa [#allocation4], 0
    %s11 = scalar_lea.sflag [#allocation4], 1
    %12 = vsyncpa %s11, 0
    loop: start=0, step=1, limit=4
    $region2: #{dwsep_forward.1} parent=1 // loop_pre_header
      _
    $region3: #{dwsep_forward.1} parent=1 // loop_header
      %s14 = sphi 0, %s18
      %p15 = scmp.ge.s32.totalorder %s14, 4
      %s24 = sphi 0, %s26
      %s27 = sphi 0, %s24
      %s28 = sphi 0, %s27
      %s44 = sphi 0, %s28
      %s48 = sphi 0, %s48
      %s50 = sphi 0, %s48
      %s51 = sphi 0, %s50
      %s65 = sphi 0, %s51
      %s69 = sphi 0, %s69
      %s71 = sphi 0, %s69
      %s72 = sphi 0, %s71
      %s86 = sphi 0, %s72
      %s90 = sphi 0, %s90
      %s92 = sphi 0, %s90
      %s93 = sphi 0, %s92
      %s107 = sphi 0, %s93
      %s111 = sphi 0, %s111
      %s113 = sphi 0, %s111
      %s114 = sphi 0, %s113
      %s128 = sphi 0, %s114
      %s134 = sphi 0, %s136
      %s137 = sphi 0, %s134
      %s138 = sphi 0, %s137
      %s154 = sphi 0, %s138
    $region4: #{dwsep_forward.1} parent=1 // loop_header_branch
      %17 = sbr.rel (%p15) target = $region8
    $region5: #{dwsep_forward.1} parent=1 // loop_body
      %s19 = ssub.s32 %s14, 1
      %s20 = ssub.s32 %s14, 2
      %s21 = sadd.s32 %s14, 1
      %s22 = ssub.s32 %s14, %s21
      %p23 = scmp.eq.s32.totalorder %s22, 0
      %s25 = sadd.s32 %s24, 1
      %s26 = scalar_select %p23, %s24, %s25
      %p29 = pneg %p23
      %p30 = scmp.eq.s32.totalorder %s14, 1
      %p31 = por %p29, %p30
      %p32 = scmp.ne.s32.totalorder %s24, %s27
      %p33 = scmp.eq.s32.totalorder %s14, 0
      %p34 = por %p32, %p33
      %p35 = scmp.ne.s32.totalorder %s24, %s27
      %p36 = scmp.eq.s32.totalorder %s19, 1
      %p37 = por %p35, %p36
      %p38 = scmp.ne.s32.totalorder %s27, %s28
      %p39 = scmp.eq.s32.totalorder %s19, 0
      %p40 = por %p38, %p39
      %p41 = scmp.ne.s32.totalorder %s27, %s28
      %p42 = scmp.eq.s32.totalorder %s20, 1
      %p43 = por %p41, %p42
      %p45 = scmp.ne.s32.totalorder %s28, %s44
      %p46 = scmp.eq.s32.totalorder %s20, 0
      %p47 = por %p45, %p46
      %s49 = sadd.s32 %s48, 1
      %p52 = scmp.eq.s32.totalorder %s14, 1
      %p53 = scmp.ne.s32.totalorder %s48, %s50
      %p54 = scmp.eq.s32.totalorder %s14, 0
      %p55 = por %p53, %p54
      %p56 = scmp.ne.s32.totalorder %s48, %s50
      %p57 = scmp.eq.s32.totalorder %s19, 1
      %p58 = por %p56, %p57
      %p59 = scmp.ne.s32.totalorder %s50, %s51
      %p60 = scmp.eq.s32.totalorder %s19, 0
      %p61 = por %p59, %p60
      %p62 = scmp.ne.s32.totalorder %s50, %s51
      %p63 = scmp.eq.s32.totalorder %s20, 1
      %p64 = por %p62, %p63
      %p66 = scmp.ne.s32.totalorder %s51, %s65
      %p67 = scmp.eq.s32.totalorder %s20, 0
      %p68 = por %p66, %p67
      %s70 = sadd.s32 %s69, 1
      %p73 = scmp.eq.s32.totalorder %s14, 1
      %p74 = scmp.ne.s32.totalorder %s69, %s71
      %p75 = scmp.eq.s32.totalorder %s14, 0
      %p76 = por %p74, %p75
      %p77 = scmp.ne.s32.totalorder %s69, %s71
      %p78 = scmp.eq.s32.totalorder %s19, 1
      %p79 = por %p77, %p78
      %p80 = scmp.ne.s32.totalorder %s71, %s72
      %p81 = scmp.eq.s32.totalorder %s19, 0
      %p82 = por %p80, %p81
      %p83 = scmp.ne.s32.totalorder %s71, %s72
      %p84 = scmp.eq.s32.totalorder %s20, 1
      %p85 = por %p83, %p84
      %p87 = scmp.ne.s32.totalorder %s72, %s86
      %p88 = scmp.eq.s32.totalorder %s20, 0
      %p89 = por %p87, %p88
      %s91 = sadd.s32 %s90, 1
      %p94 = scmp.eq.s32.totalorder %s14, 1
      %p95 = scmp.ne.s32.totalorder %s90, %s92
      %p96 = scmp.eq.s32.totalorder %s14, 0
      %p97 = por %p95, %p96
      %p98 = scmp.ne.s32.totalorder %s90, %s92
      %p99 = scmp.eq.s32.totalorder %s19, 1
      %p100 = por %p98, %p99
      %p101 = scmp.ne.s32.totalorder %s92, %s93
      %p102 = scmp.eq.s32.totalorder %s19, 0
      %p103 = por %p101, %p102
      %p104 = scmp.ne.s32.totalorder %s92, %s93
      %p105 = scmp.eq.s32.totalorder %s20, 1
      %p106 = por %p104, %p105
      %p108 = scmp.ne.s32.totalorder %s93, %s107
      %p109 = scmp.eq.s32.totalorder %s20, 0
      %p110 = por %p108, %p109
      %s112 = sadd.s32 %s111, 1
      %p115 = scmp.eq.s32.totalorder %s14, 1
      %p116 = scmp.ne.s32.totalorder %s111, %s113
      %p117 = scmp.eq.s32.totalorder %s14, 0
      %p118 = por %p116, %p117
      %p119 = scmp.ne.s32.totalorder %s111, %s113
      %p120 = scmp.eq.s32.totalorder %s19, 1
      %p121 = por %p119, %p120
      %p122 = scmp.ne.s32.totalorder %s113, %s114
      %p123 = scmp.eq.s32.totalorder %s19, 0
      %p124 = por %p122, %p123
      %p125 = scmp.ne.s32.totalorder %s113, %s114
      %p126 = scmp.eq.s32.totalorder %s20, 1
      %p127 = por %p125, %p126
      %p129 = scmp.ne.s32.totalorder %s114, %s128
      %p130 = scmp.eq.s32.totalorder %s20, 0
      %p131 = por %p129, %p130
      %s132 = ssub.s32 %s14, %s21
      %p133 = scmp.eq.s32.totalorder %s132, 0
      %s135 = sadd.s32 %s134, 1
      %s136 = scalar_select %p133, %s134, %s135
      %p139 = pneg %p133
      %p140 = scmp.eq.s32.totalorder %s14, 1
      %p141 = por %p139, %p140
      %p142 = scmp.ne.s32.totalorder %s134, %s137
      %p143 = scmp.eq.s32.totalorder %s14, 0
      %p144 = por %p142, %p143
      %p145 = scmp.ne.s32.totalorder %s134, %s137
      %p146 = scmp.eq.s32.totalorder %s19, 1
      %p147 = por %p145, %p146
      %p148 = scmp.ne.s32.totalorder %s137, %s138
      %p149 = scmp.eq.s32.totalorder %s19, 0
      %p150 = por %p148, %p149
      %p151 = scmp.ne.s32.totalorder %s137, %s138
      %p152 = scmp.eq.s32.totalorder %s20, 1
      %p153 = por %p151, %p152
      %p155 = scmp.ne.s32.totalorder %s138, %s154
      %p156 = scmp.eq.s32.totalorder %s20, 0
      %p157 = por %p155, %p156
      %p158 = scmp.le.s32.totalorder 1, %s14
      %p159 = scmp.lt.s32.totalorder %s14, 3
      %p160 = pnand %p158, %p159
      %p161 = pneg %p160
      // Predicated region
      $region9: #{dwsep_forward.1} parent=5 // pred_check
        _
      $region10: #{dwsep_forward.1} parent=5 // pred_check_branch
        %163 = sbr.rel (%p160) target = $region12
      $region11: #{dwsep_forward.1} parent=5 // pred_region
        %s164 = ssub.s32 %s14, 1
        // Predicated region
        $region13: #{dwsep_forward.1} parent=11 // pred_check
          %p165 = pneg %p61
        $region14: #{dwsep_forward.1} parent=11 // pred_check_branch
          %167 = sbr.rel (%p165) target = $region16
        $region15: #{dwsep_forward.1} parent=11 // pred_region
          _
        $region16: #{dwsep_forward.1} parent=11 // pred_fallthru
          _
        // Predicated region
        $region17: #{dwsep_forward.1} parent=11 // pred_check
          %p168 = pneg %p82
        $region18: #{dwsep_forward.1} parent=11 // pred_check_branch
          %170 = sbr.rel (%p168) target = $region20
        $region19: #{dwsep_forward.1} parent=11 // pred_region
          _
        $region20: #{dwsep_forward.1} parent=11 // pred_fallthru
          _
        // Predicated region
        $region21: #{dwsep_forward.1} parent=11 // pred_check
          %p171 = pneg %p103
        $region22: #{dwsep_forward.1} parent=11 // pred_check_branch
          %173 = sbr.rel (%p171) target = $region24
        $region23: #{dwsep_forward.1} parent=11 // pred_region
          _
        $region24: #{dwsep_forward.1} parent=11 // pred_fallthru
          _
        // Predicated region
        $region25: #{dwsep_forward.1} parent=11 // pred_check
          %p174 = pneg %p124
        $region26: #{dwsep_forward.1} parent=11 // pred_check_branch
          %176 = sbr.rel (%p174) target = $region28
        $region27: #{dwsep_forward.1} parent=11 // pred_region
          _
        $region28: #{dwsep_forward.1} parent=11 // pred_fallthru
          _
      $region12: #{dwsep_forward.1} parent=5 // pred_fallthru
        _
      %p177 = scmp.lt.s32.totalorder %s14, 2
      // Predicated region
      $region29: #{dwsep_forward.1} parent=5 // pred_check
        %p178 = pneg %p177
      $region30: #{dwsep_forward.1} parent=5 // pred_check_branch
        %180 = sbr.rel (%p178) target = $region32
      $region31: #{dwsep_forward.1} parent=5 // pred_region
        // Predicated region
        $region33: #{dwsep_forward.1} parent=31 // pred_check
          %p181 = pneg %p34
        $region34: #{dwsep_forward.1} parent=31 // pred_check_branch
          %183 = sbr.rel (%p181) target = $region36
        $region35: #{dwsep_forward.1} parent=31 // pred_region
          %p184 = scmp.lt.s32.totalorder %s14, 1
          %s185 = scalar_select %p184, %s14, 1
          %s186 = smul.addr %s185, 32
          %s187 = smul.addr %s186, 4
          %s188 = scalar_lea.vmem %s0, %s187
        $region36: #{dwsep_forward.1} parent=31 // pred_fallthru
          _
      $region32: #{dwsep_forward.1} parent=5 // pred_fallthru
        _
      %p189 = scmp.le.s32.totalorder 1, %s14
      %p190 = scmp.lt.s32.totalorder %s14, 3
      %p191 = pnand %p189, %p190
      %p192 = pneg %p191
      // Predicated region
      $region37: #{dwsep_forward.1} parent=5 // pred_check
        _
      $region38: #{dwsep_forward.1} parent=5 // pred_check_branch
        %194 = sbr.rel (%p191) target = $region40
      $region39: #{dwsep_forward.1} parent=5 // pred_region
        %s195 = ssub.s32 %s14, 1
        %p196 = scmp.lt.s32.totalorder %s19, 1
        %s197 = scalar_select %p196, %s19, 1
        %s198 = smul.addr %s197, 32
        %s199 = smul.addr %s198, 4
        %s200 = scalar_lea.vmem %s0, %s199
        %p201 = pneg %p40
        %p202 = pneg %p37
        %p203 = pneg %p61
        %p204 = pneg %p58
        %p205 = pneg %p82
        %p206 = pneg %p79
        %p207 = pneg %p103
        %p208 = pneg %p100
        %p209 = pneg %p124
        %p210 = pneg %p121
        %p211 = pneg %p150
        %p212 = pneg %p147
        %s213 = sand.u32 %s137, 1
        %s214 = scalar_lea.sflag [#allocation4], %s213
        %s215 = sand.u32 %s137, 1
        %s216 = smul.addr %s215, 256
        %s217 = scalar_lea.vmem [#allocation3], %s216
        %p218 = scmp.lt.s32.totalorder %s19, 1
        %s219 = scalar_select %p218, %s19, 1
        %s220 = smul.addr %s219, 32
        %s221 = smul.addr %s220, 4
        %s222 = scalar_lea.vmem %s0, %s221
        %vm224 = vcmask 523264
        %225 = vst.msk [vmem:[#allocation2] sm:$0xff] %vm224, 0.0
        %226 = vst.msk [vmem:[#allocation2 + $0x8] sm:$0xff] %vm224, 0.0
        %227 = vst.msk [vmem:[#allocation2 + $0x10] sm:$0xff] %vm224, 0.0
        %228 = vst.msk [vmem:[#allocation2 + $0x18] sm:$0xff] %vm224, 0.0
        %229 = vst.msk [vmem:[#allocation2 + $0x20] sm:$0xff] %vm224, 0.0
        %230 = vst.msk [vmem:[#allocation2 + $0x28] sm:$0xff] %vm224, 0.0
        %231 = vst.msk [vmem:[#allocation2 + $0x30] sm:$0xff] %vm224, 0.0
        %232 = vst.msk [vmem:[#allocation2 + $0x38] sm:$0xff] %vm224, 0.0
        %233 = vst.msk [vmem:[#allocation2 + $0x40] sm:$0xff] %vm224, 0.0
        %234 = vst.msk [vmem:[#allocation2 + $0x48] sm:$0xff] %vm224, 0.0
        %235 = vst.msk [vmem:[#allocation2 + $0x50] sm:$0xff] %vm224, 0.0
        %236 = vst.msk [vmem:[#allocation2 + $0x58] sm:$0xff] %vm224, 0.0
        %237 = vst.msk [vmem:[#allocation2 + $0x60] sm:$0xff] %vm224, 0.0
        %238 = vst.msk [vmem:[#allocation2 + $0x68] sm:$0xff] %vm224, 0.0
        %239 = vst.msk [vmem:[#allocation2 + $0x70] sm:$0xff] %vm224, 0.0
        %240 = vst.msk [vmem:[#allocation2 + $0x78] sm:$0xff] %vm224, 0.0
        %241 = vst.msk [vmem:[#allocation2 + $0x80] sm:$0xff] %vm224, 0.0
        %242 = vst.msk [vmem:[#allocation2 + $0x88] sm:$0xff] %vm224, 0.0
        %243 = vst.msk [vmem:[#allocation2 + $0x90] sm:$0xff] %vm224, 0.0
        %244 = vst.msk [vmem:[#allocation2 + $0x98] sm:$0xff] %vm224, 0.0
        %245 = vst.msk [vmem:[#allocation2 + $0xa0] sm:$0xff] %vm224, 0.0
        %246 = vst.msk [vmem:[#allocation2 + $0xa8] sm:$0xff] %vm224, 0.0
        %247 = vst.msk [vmem:[#allocation2 + $0xb0] sm:$0xff] %vm224, 0.0
        %248 = vst.msk [vmem:[#allocation2 + $0xb8] sm:$0xff] %vm224, 0.0
        %249 = vst.msk [vmem:[#allocation2 + $0xc0] sm:$0xff] %vm224, 0.0
        %250 = vst.msk [vmem:[#allocation2 + $0xc8] sm:$0xff] %vm224, 0.0
        %251 = vst.msk [vmem:[#allocation2 + $0xd0] sm:$0xff] %vm224, 0.0
        %252 = vst.msk [vmem:[#allocation2 + $0xd8] sm:$0xff] %vm224, 0.0
        %253 = vst.msk [vmem:[#allocation2 + $0xe0] sm:$0xff] %vm224, 0.0
        %254 = vst.msk [vmem:[#allocation2 + $0xe8] sm:$0xff] %vm224, 0.0
        %255 = vst.msk [vmem:[#allocation2 + $0xf0] sm:$0xff] %vm224, 0.0
        %256 = vst.msk [vmem:[#allocation2 + $0xf8] sm:$0xff] %vm224, 0.0
        %257 = vst.msk [vmem:[#allocation2 + $0x100] sm:$0xff] %vm224, 0.0
        %258 = vst.msk [vmem:[#allocation2 + $0x108] sm:$0xff] %vm224, 0.0
        %259 = vst.msk [vmem:[#allocation2 + $0x110] sm:$0xff] %vm224, 0.0
        %260 = vst.msk [vmem:[#allocation2 + $0x118] sm:$0xff] %vm224, 0.0
        %261 = vst.msk [vmem:[#allocation2 + $0x120] sm:$0xff] %vm224, 0.0
        %262 = vst.msk [vmem:[#allocation2 + $0x128] sm:$0xff] %vm224, 0.0
        %263 = vst.msk [vmem:[#allocation2 + $0x130] sm:$0xff] %vm224, 0.0
        %264 = vst.msk [vmem:[#allocation2 + $0x138] sm:$0xff] %vm224, 0.0
        %265 = vst.msk [vmem:[#allocation2 + $0x140] sm:$0xff] %vm224, 0.0
        %266 = vst.msk [vmem:[#allocation2 + $0x148] sm:$0xff] %vm224, 0.0
        %267 = vst.msk [vmem:[#allocation2 + $0x150] sm:$0xff] %vm224, 0.0
        %268 = vst.msk [vmem:[#allocation2 + $0x158] sm:$0xff] %vm224, 0.0
        %269 = vst.msk [vmem:[#allocation2 + $0x160] sm:$0xff] %vm224, 0.0
        %270 = vst.msk [vmem:[#allocation2 + $0x168] sm:$0xff] %vm224, 0.0
        %271 = vst.msk [vmem:[#allocation2 + $0x170] sm:$0xff] %vm224, 0.0
        %272 = vst.msk [vmem:[#allocation2 + $0x178] sm:$0xff] %vm224, 0.0
        %273 = vst.msk [vmem:[#allocation2 + $0x180] sm:$0xff] %vm224, 0.0
        %274 = vst.msk [vmem:[#allocation2 + $0x188] sm:$0xff] %vm224, 0.0
        %275 = vst.msk [vmem:[#allocation2 + $0x190] sm:$0xff] %vm224, 0.0
        %276 = vst.msk [vmem:[#allocation2 + $0x198] sm:$0xff] %vm224, 0.0
        %277 = vst.msk [vmem:[#allocation2 + $0x1a0] sm:$0xff] %vm224, 0.0
        %278 = vst.msk [vmem:[#allocation2 + $0x1a8] sm:$0xff] %vm224, 0.0
        %279 = vst.msk [vmem:[#allocation2 + $0x1b0] sm:$0xff] %vm224, 0.0
        %280 = vst.msk [vmem:[#allocation2 + $0x1b8] sm:$0xff] %vm224, 0.0
        %281 = vst.msk [vmem:[#allocation2 + $0x1c0] sm:$0xff] %vm224, 0.0
        %282 = vst.msk [vmem:[#allocation2 + $0x1c8] sm:$0xff] %vm224, 0.0
        %283 = vst.msk [vmem:[#allocation2 + $0x1d0] sm:$0xff] %vm224, 0.0
        %284 = vst.msk [vmem:[#allocation2 + $0x1d8] sm:$0xff] %vm224, 0.0
        %285 = vst.msk [vmem:[#allocation2 + $0x1e0] sm:$0xff] %vm224, 0.0
        %286 = vst.msk [vmem:[#allocation2 + $0x1e8] sm:$0xff] %vm224, 0.0
        %287 = vst.msk [vmem:[#allocation2 + $0x1f0] sm:$0xff] %vm224, 0.0
        %288 = vst.msk [vmem:[#allocation2 + $0x1f8] sm:$0xff] %vm224, 0.0
        %289 = vst.msk [vmem:[#allocation2 + $0x200] sm:$0xff] %vm224, 0.0
        %290 = vst.msk [vmem:[#allocation2 + $0x208] sm:$0xff] %vm224, 0.0
        %291 = vst.msk [vmem:[#allocation2 + $0x210] sm:$0xff] %vm224, 0.0
        %292 = vst.msk [vmem:[#allocation2 + $0x218] sm:$0xff] %vm224, 0.0
        %293 = vst.msk [vmem:[#allocation2 + $0x220] sm:$0xff] %vm224, 0.0
        %294 = vst.msk [vmem:[#allocation2 + $0x228] sm:$0xff] %vm224, 0.0
        %295 = vst.msk [vmem:[#allocation2 + $0x230] sm:$0xff] %vm224, 0.0
        %296 = vst.msk [vmem:[#allocation2 + $0x238] sm:$0xff] %vm224, 0.0
        %v297 = vld [vmem:[%s222] sm:$0xf]
        %v298 = vld [vmem:[%s222 + $0x4] sm:$0xf]
        %v299 = vld [vmem:[%s222 + $0x8] sm:$0xf]
        %v300 = vld [vmem:[%s222 + $0xc] sm:$0xf]
        %v301 = vld [vmem:[%s222 + $0x10] sm:$0xf]
        %v302 = vld [vmem:[%s222 + $0x14] sm:$0xf]
        %v303 = vld [vmem:[%s222 + $0x18] sm:$0xf]
        %v304 = vld [vmem:[%s222 + $0x1c] sm:$0xf]
        %v305 = vld [vmem:[%s222 + $0x20] sm:$0xf]
        %v306 = vld [vmem:[%s222 + $0x24] sm:$0xf]
        %v307 = vld [vmem:[%s222 + $0x28] sm:$0xf]
        %v308 = vld [vmem:[%s222 + $0x2c] sm:$0xf]
        %v309 = vld [vmem:[%s222 + $0x30] sm:$0xf]
        %v310 = vld [vmem:[%s222 + $0x34] sm:$0xf]
        %v311 = vld [vmem:[%s222 + $0x38] sm:$0xf]
        %v312 = vld [vmem:[%s222 + $0x3c] sm:$0xf]
        %v313 = vld [vmem:[%s222 + $0x40] sm:$0xf]
        %v314 = vld [vmem:[%s222 + $0x44] sm:$0xf]
        %v315 = vld [vmem:[%s222 + $0x48] sm:$0xf]
        %v316 = vld [vmem:[%s222 + $0x4c] sm:$0xf]
        %v317 = vld [vmem:[%s222 + $0x50] sm:$0xf]
        %v318 = vld [vmem:[%s222 + $0x54] sm:$0xf]
        %v319 = vld [vmem:[%s222 + $0x58] sm:$0xf]
        %v320 = vld [vmem:[%s222 + $0x5c] sm:$0xf]
        %v321 = vld [vmem:[%s222 + $0x60] sm:$0xf]
        %v322 = vld [vmem:[%s222 + $0x64] sm:$0xf]
        %v323 = vld [vmem:[%s222 + $0x68] sm:$0xf]
        %v324 = vld [vmem:[%s222 + $0x6c] sm:$0xf]
        %v325 = vld [vmem:[%s222 + $0x70] sm:$0xf]
        %v326 = vld [vmem:[%s222 + $0x74] sm:$0xf]
        %v327 = vld [vmem:[%s222 + $0x78] sm:$0xf]
        %v328 = vld [vmem:[%s222 + $0x7c] sm:$0xf]
        %v329 = vunpack.c.l.bf16 %v297
        %v330 = vunpack.c.l.bf16 %v298
        %v331 = vunpack.c.l.bf16 %v299
        %v332 = vunpack.c.l.bf16 %v300
        %v333 = vunpack.c.l.bf16 %v301
        %v334 = vunpack.c.l.bf16 %v302
        %v335 = vunpack.c.l.bf16 %v303
        %v336 = vunpack.c.l.bf16 %v304
        %v337 = vunpack.c.l.bf16 %v305
        %v338 = vunpack.c.l.bf16 %v306
        %v339 = vunpack.c.l.bf16 %v307
        %v340 = vunpack.c.l.bf16 %v308
        %v341 = vunpack.c.l.bf16 %v309
        %v342 = vunpack.c.l.bf16 %v310
        %v343 = vunpack.c.l.bf16 %v311
        %v344 = vunpack.c.l.bf16 %v312
        %v345 = vunpack.c.l.bf16 %v313
        %v346 = vunpack.c.l.bf16 %v314
        %v347 = vunpack.c.l.bf16 %v315
        %v348 = vunpack.c.l.bf16 %v316
        %v349 = vunpack.c.l.bf16 %v317
        %v350 = vunpack.c.l.bf16 %v318
        %v351 = vunpack.c.l.bf16 %v319
        %v352 = vunpack.c.l.bf16 %v320
        %v353 = vunpack.c.l.bf16 %v321
        %v354 = vunpack.c.l.bf16 %v322
        %v355 = vunpack.c.l.bf16 %v323
        %v356 = vunpack.c.l.bf16 %v324
        %v357 = vunpack.c.l.bf16 %v325
        %v358 = vunpack.c.l.bf16 %v326
        %v359 = vunpack.c.l.bf16 %v327
        %v360 = vunpack.c.l.bf16 %v328
        %s361 = scalar_lea.vmem [#allocation2], 32
        %362 = vst.msk [vmem:[%s361 + $0x8] sm:$0xff] %vm224, %v329
        %363 = vst.msk [vmem:[%s361 + $0x10] sm:$0xff] %vm224, %v330
        %364 = vst.msk [vmem:[%s361 + $0x28] sm:$0xff] %vm224, %v331
        %365 = vst.msk [vmem:[%s361 + $0x30] sm:$0xff] %vm224, %v332
        %366 = vst.msk [vmem:[%s361 + $0x48] sm:$0xff] %vm224, %v333
        %367 = vst.msk [vmem:[%s361 + $0x50] sm:$0xff] %vm224, %v334
        %368 = vst.msk [vmem:[%s361 + $0x68] sm:$0xff] %vm224, %v335
        %369 = vst.msk [vmem:[%s361 + $0x70] sm:$0xff] %vm224, %v336
        %370 = vst.msk [vmem:[%s361 + $0x88] sm:$0xff] %vm224, %v337
        %371 = vst.msk [vmem:[%s361 + $0x90] sm:$0xff] %vm224, %v338
        %372 = vst.msk [vmem:[%s361 + $0xa8] sm:$0xff] %vm224, %v339
        %373 = vst.msk [vmem:[%s361 + $0xb0] sm:$0xff] %vm224, %v340
        %374 = vst.msk [vmem:[%s361 + $0xc8] sm:$0xff] %vm224, %v341
        %375 = vst.msk [vmem:[%s361 + $0xd0] sm:$0xff] %vm224, %v342
        %376 = vst.msk [vmem:[%s361 + $0xe8] sm:$0xff] %vm224, %v343
        %377 = vst.msk [vmem:[%s361 + $0xf0] sm:$0xff] %vm224, %v344
        %378 = vst.msk [vmem:[%s361 + $0x108] sm:$0xff] %vm224, %v345
        %379 = vst.msk [vmem:[%s361 + $0x110] sm:$0xff] %vm224, %v346
        %380 = vst.msk [vmem:[%s361 + $0x128] sm:$0xff] %vm224, %v347
        %381 = vst.msk [vmem:[%s361 + $0x130] sm:$0xff] %vm224, %v348
        %382 = vst.msk [vmem:[%s361 + $0x148] sm:$0xff] %vm224, %v349
        %383 = vst.msk [vmem:[%s361 + $0x150] sm:$0xff] %vm224, %v350
        %384 = vst.msk [vmem:[%s361 + $0x168] sm:$0xff] %vm224, %v351
        %385 = vst.msk [vmem:[%s361 + $0x170] sm:$0xff] %vm224, %v352
        %386 = vst.msk [vmem:[%s361 + $0x188] sm:$0xff] %vm224, %v353
        %387 = vst.msk [vmem:[%s361 + $0x190] sm:$0xff] %vm224, %v354
        %388 = vst.msk [vmem:[%s361 + $0x1a8] sm:$0xff] %vm224, %v355
        %389 = vst.msk [vmem:[%s361 + $0x1b0] sm:$0xff] %vm224, %v356
        %390 = vst.msk [vmem:[%s361 + $0x1c8] sm:$0xff] %vm224, %v357
        %391 = vst.msk [vmem:[%s361 + $0x1d0] sm:$0xff] %vm224, %v358
        %392 = vst.msk [vmem:[%s361 + $0x1e8] sm:$0xff] %vm224, %v359
        %393 = vst.msk [vmem:[%s361 + $0x1f0] sm:$0xff] %vm224, %v360
        %v394 = vld [vmem:[%s1] sm:$0xff]
        %v395 = vld [vmem:[%s1 + $0x8] sm:$0x1]
        %v396 = vld [vmem:[#allocation2 + $0x7] sm:$0xff]
        %v397 = vld [vmem:[#allocation2 + $0xf] sm:$0xff]
        %v398 = vld [vmem:[#allocation2 + $0x27] sm:$0xff]
        %v399 = vld [vmem:[#allocation2 + $0x2f] sm:$0xff]
        %v400 = vld [vmem:[#allocation2 + $0x47] sm:$0xff]
        %v401 = vld [vmem:[#allocation2 + $0x4f] sm:$0xff]
        %v402 = vld [vmem:[#allocation2 + $0x67] sm:$0xff]
        %v403 = vld [vmem:[#allocation2 + $0x6f] sm:$0xff]
        %v404 = vld [vmem:[#allocation2 + $0x87] sm:$0xff]
        %v405 = vld [vmem:[#allocation2 + $0x8f] sm:$0xff]
        %v406 = vld [vmem:[#allocation2 + $0xa7] sm:$0xff]
        %v407 = vld [vmem:[#allocation2 + $0xaf] sm:$0xff]
        %v408 = vld [vmem:[#allocation2 + $0xc7] sm:$0xff]
        %v409 = vld [vmem:[#allocation2 + $0xcf] sm:$0xff]
        %v410 = vld [vmem:[#allocation2 + $0xe7] sm:$0xff]
        %v411 = vld [vmem:[#allocation2 + $0xef] sm:$0xff]
        %v412 = vld [vmem:[#allocation2 + $0x107] sm:$0xff]
        %v413 = vld [vmem:[#allocation2 + $0x10f] sm:$0xff]
        %v414 = vld [vmem:[#allocation2 + $0x127] sm:$0xff]
        %v415 = vld [vmem:[#allocation2 + $0x12f] sm:$0xff]
        %v416 = vld [vmem:[#allocation2 + $0x147] sm:$0xff]
        %v417 = vld [vmem:[#allocation2 + $0x14f] sm:$0xff]
        %v418 = vld [vmem:[#allocation2 + $0x167] sm:$0xff]
        %v419 = vld [vmem:[#allocation2 + $0x16f] sm:$0xff]
        %v420 = vld [vmem:[#allocation2 + $0x187] sm:$0xff]
        %v421 = vld [vmem:[#allocation2 + $0x18f] sm:$0xff]
        %v422 = vld [vmem:[#allocation2 + $0x1a7] sm:$0xff]
        %v423 = vld [vmem:[#allocation2 + $0x1af] sm:$0xff]
        %v424 = vld [vmem:[#allocation2 + $0x1c7] sm:$0xff]
        %v425 = vld [vmem:[#allocation2 + $0x1cf] sm:$0xff]
        %v426 = vld [vmem:[#allocation2 + $0x1e7] sm:$0xff]
        %v427 = vld [vmem:[#allocation2 + $0x1ef] sm:$0xff]
        %v428 = vlaneseq
        %v429 = vshrl.u32 %v428, 7
        %v430 = vsub.s32 0, %v429
        %v431 = vrot.slane %v394, %v430
        %v432 = vmul.f32 %v396, %v431
        %v433 = vmul.f32 %v397, %v431
        %v434 = vmul.f32 %v398, %v431
        %v435 = vmul.f32 %v399, %v431
        %v436 = vmul.f32 %v400, %v431
        %v437 = vmul.f32 %v401, %v431
        %v438 = vmul.f32 %v402, %v431
        %v439 = vmul.f32 %v403, %v431
        %v440 = vmul.f32 %v404, %v431
        %v441 = vmul.f32 %v405, %v431
        %v442 = vmul.f32 %v406, %v431
        %v443 = vmul.f32 %v407, %v431
        %v444 = vmul.f32 %v408, %v431
        %v445 = vmul.f32 %v409, %v431
        %v446 = vmul.f32 %v410, %v431
        %v447 = vmul.f32 %v411, %v431
        %v448 = vmul.f32 %v412, %v431
        %v449 = vmul.f32 %v413, %v431
        %v450 = vmul.f32 %v414, %v431
        %v451 = vmul.f32 %v415, %v431
        %v452 = vmul.f32 %v416, %v431
        %v453 = vmul.f32 %v417, %v431
        %v454 = vmul.f32 %v418, %v431
        %v455 = vmul.f32 %v419, %v431
        %v456 = vmul.f32 %v420, %v431
        %v457 = vmul.f32 %v421, %v431
        %v458 = vmul.f32 %v422, %v431
        %v459 = vmul.f32 %v423, %v431
        %v460 = vmul.f32 %v424, %v431
        %v461 = vmul.f32 %v425, %v431
        %v462 = vmul.f32 %v426, %v431
        %v463 = vmul.f32 %v427, %v431
        %v464 = vadd.f32 %v432, 0.0
        %v465 = vadd.f32 %v433, 0.0
        %v466 = vadd.f32 %v434, 0.0
        %v467 = vadd.f32 %v435, 0.0
        %v468 = vadd.f32 %v436, 0.0
        %v469 = vadd.f32 %v437, 0.0
        %v470 = vadd.f32 %v438, 0.0
        %v471 = vadd.f32 %v439, 0.0
        %v472 = vadd.f32 %v440, 0.0
        %v473 = vadd.f32 %v441, 0.0
        %v474 = vadd.f32 %v442, 0.0
        %v475 = vadd.f32 %v443, 0.0
        %v476 = vadd.f32 %v444, 0.0
        %v477 = vadd.f32 %v445, 0.0
        %v478 = vadd.f32 %v446, 0.0
        %v479 = vadd.f32 %v447, 0.0
        %v480 = vadd.f32 %v448, 0.0
        %v481 = vadd.f32 %v449, 0.0
        %v482 = vadd.f32 %v450, 0.0
        %v483 = vadd.f32 %v451, 0.0
        %v484 = vadd.f32 %v452, 0.0
        %v485 = vadd.f32 %v453, 0.0
        %v486 = vadd.f32 %v454, 0.0
        %v487 = vadd.f32 %v455, 0.0
        %v488 = vadd.f32 %v456, 0.0
        %v489 = vadd.f32 %v457, 0.0
        %v490 = vadd.f32 %v458, 0.0
        %v491 = vadd.f32 %v459, 0.0
        %v492 = vadd.f32 %v460, 0.0
        %v493 = vadd.f32 %v461, 0.0
        %v494 = vadd.f32 %v462, 0.0
        %v495 = vadd.f32 %v463, 0.0
        %v496 = vld [vmem:[#allocation2 + $0x8] sm:$0xff]
        %v497 = vld [vmem:[#allocation2 + $0x10] sm:$0xff]
        %v498 = vld [vmem:[#allocation2 + $0x28] sm:$0xff]
        %v499 = vld [vmem:[#allocation2 + $0x30] sm:$0xff]
        %v500 = vld [vmem:[#allocation2 + $0x48] sm:$0xff]
        %v501 = vld [vmem:[#allocation2 + $0x50] sm:$0xff]
        %v502 = vld [vmem:[#allocation2 + $0x68] sm:$0xff]
        %v503 = vld [vmem:[#allocation2 + $0x70] sm:$0xff]
        %v504 = vld [vmem:[#allocation2 + $0x88] sm:$0xff]
        %v505 = vld [vmem:[#allocation2 + $0x90] sm:$0xff]
        %v506 = vld [vmem:[#allocation2 + $0xa8] sm:$0xff]
        %v507 = vld [vmem:[#allocation2 + $0xb0] sm:$0xff]
        %v508 = vld [vmem:[#allocation2 + $0xc8] sm:$0xff]
        %v509 = vld [vmem:[#allocation2 + $0xd0] sm:$0xff]
        %v510 = vld [vmem:[#allocation2 + $0xe8] sm:$0xff]
        %v511 = vld [vmem:[#allocation2 + $0xf0] sm:$0xff]
        %v512 = vld [vmem:[#allocation2 + $0x108] sm:$0xff]
        %v513 = vld [vmem:[#allocation2 + $0x110] sm:$0xff]
        %v514 = vld [vmem:[#allocation2 + $0x128] sm:$0xff]
        %v515 = vld [vmem:[#allocation2 + $0x130] sm:$0xff]
        %v516 = vld [vmem:[#allocation2 + $0x148] sm:$0xff]
        %v517 = vld [vmem:[#allocation2 + $0x150] sm:$0xff]
        %v518 = vld [vmem:[#allocation2 + $0x168] sm:$0xff]
        %v519 = vld [vmem:[#allocation2 + $0x170] sm:$0xff]
        %v520 = vld [vmem:[#allocation2 + $0x188] sm:$0xff]
        %v521 = vld [vmem:[#allocation2 + $0x190] sm:$0xff]
        %v522 = vld [vmem:[#allocation2 + $0x1a8] sm:$0xff]
        %v523 = vld [vmem:[#allocation2 + $0x1b0] sm:$0xff]
        %v524 = vld [vmem:[#allocation2 + $0x1c8] sm:$0xff]
        %v525 = vld [vmem:[#allocation2 + $0x1d0] sm:$0xff]
        %v526 = vld [vmem:[#allocation2 + $0x1e8] sm:$0xff]
        %v527 = vld [vmem:[#allocation2 + $0x1f0] sm:$0xff]
        %v528 = vlaneseq
        %v529 = vshrl.u32 %v528, 7
        %v530 = vsub.s32 1, %v529
        %v531 = vrot.slane %v394, %v530
        %v532 = vmul.f32 %v496, %v531
        %v533 = vmul.f32 %v497, %v531
        %v534 = vmul.f32 %v498, %v531
        %v535 = vmul.f32 %v499, %v531
        %v536 = vmul.f32 %v500, %v531
        %v537 = vmul.f32 %v501, %v531
        %v538 = vmul.f32 %v502, %v531
        %v539 = vmul.f32 %v503, %v531
        %v540 = vmul.f32 %v504, %v531
        %v541 = vmul.f32 %v505, %v531
        %v542 = vmul.f32 %v506, %v531
        %v543 = vmul.f32 %v507, %v531
        %v544 = vmul.f32 %v508, %v531
        %v545 = vmul.f32 %v509, %v531
        %v546 = vmul.f32 %v510, %v531
        %v547 = vmul.f32 %v511, %v531
        %v548 = vmul.f32 %v512, %v531
        %v549 = vmul.f32 %v513, %v531
        %v550 = vmul.f32 %v514, %v531
        %v551 = vmul.f32 %v515, %v531
        %v552 = vmul.f32 %v516, %v531
        %v553 = vmul.f32 %v517, %v531
        %v554 = vmul.f32 %v518, %v531
        %v555 = vmul.f32 %v519, %v531
        %v556 = vmul.f32 %v520, %v531
        %v557 = vmul.f32 %v521, %v531
        %v558 = vmul.f32 %v522, %v531
        %v559 = vmul.f32 %v523, %v531
        %v560 = vmul.f32 %v524, %v531
        %v561 = vmul.f32 %v525, %v531
        %v562 = vmul.f32 %v526, %v531
        %v563 = vmul.f32 %v527, %v531
        %v564 = vadd.f32 %v464, %v532
        %v565 = vadd.f32 %v465, %v533
        %v566 = vadd.f32 %v466, %v534
        %v567 = vadd.f32 %v467, %v535
        %v568 = vadd.f32 %v468, %v536
        %v569 = vadd.f32 %v469, %v537
        %v570 = vadd.f32 %v470, %v538
        %v571 = vadd.f32 %v471, %v539
        %v572 = vadd.f32 %v472, %v540
        %v573 = vadd.f32 %v473, %v541
        %v574 = vadd.f32 %v474, %v542
        %v575 = vadd.f32 %v475, %v543
        %v576 = vadd.f32 %v476, %v544
        %v577 = vadd.f32 %v477, %v545
        %v578 = vadd.f32 %v478, %v546
        %v579 = vadd.f32 %v479, %v547
        %v580 = vadd.f32 %v480, %v548
        %v581 = vadd.f32 %v481, %v549
        %v582 = vadd.f32 %v482, %v550
        %v583 = vadd.f32 %v483, %v551
        %v584 = vadd.f32 %v484, %v552
        %v585 = vadd.f32 %v485, %v553
        %v586 = vadd.f32 %v486, %v554
        %v587 = vadd.f32 %v487, %v555
        %v588 = vadd.f32 %v488, %v556
        %v589 = vadd.f32 %v489, %v557
        %v590 = vadd.f32 %v490, %v558
        %v591 = vadd.f32 %v491, %v559
        %v592 = vadd.f32 %v492, %v560
        %v593 = vadd.f32 %v493, %v561
        %v594 = vadd.f32 %v494, %v562
        %v595 = vadd.f32 %v495, %v563
        %v596 = vld [vmem:[#allocation2 + $0x9] sm:$0xff]
        %v597 = vld [vmem:[#allocation2 + $0x11] sm:$0xff]
        %v598 = vld [vmem:[#allocation2 + $0x29] sm:$0xff]
        %v599 = vld [vmem:[#allocation2 + $0x31] sm:$0xff]
        %v600 = vld [vmem:[#allocation2 + $0x49] sm:$0xff]
        %v601 = vld [vmem:[#allocation2 + $0x51] sm:$0xff]
        %v602 = vld [vmem:[#allocation2 + $0x69] sm:$0xff]
        %v603 = vld [vmem:[#allocation2 + $0x71] sm:$0xff]
        %v604 = vld [vmem:[#allocation2 + $0x89] sm:$0xff]
        %v605 = vld [vmem:[#allocation2 + $0x91] sm:$0xff]
        %v606 = vld [vmem:[#allocation2 + $0xa9] sm:$0xff]
        %v607 = vld [vmem:[#allocation2 + $0xb1] sm:$0xff]
        %v608 = vld [vmem:[#allocation2 + $0xc9] sm:$0xff]
        %v609 = vld [vmem:[#allocation2 + $0xd1] sm:$0xff]
        %v610 = vld [vmem:[#allocation2 + $0xe9] sm:$0xff]
        %v611 = vld [vmem:[#allocation2 + $0xf1] sm:$0xff]
        %v612 = vld [vmem:[#allocation2 + $0x109] sm:$0xff]
        %v613 = vld [vmem:[#allocation2 + $0x111] sm:$0xff]
        %v614 = vld [vmem:[#allocation2 + $0x129] sm:$0xff]
        %v615 = vld [vmem:[#allocation2 + $0x131] sm:$0xff]
        %v616 = vld [vmem:[#allocation2 + $0x149] sm:$0xff]
        %v617 = vld [vmem:[#allocation2 + $0x151] sm:$0xff]
        %v618 = vld [vmem:[#allocation2 + $0x169] sm:$0xff]
        %v619 = vld [vmem:[#allocation2 + $0x171] sm:$0xff]
        %v620 = vld [vmem:[#allocation2 + $0x189] sm:$0xff]
        %v621 = vld [vmem:[#allocation2 + $0x191] sm:$0xff]
        %v622 = vld [vmem:[#allocation2 + $0x1a9] sm:$0xff]
        %v623 = vld [vmem:[#allocation2 + $0x1b1] sm:$0xff]
        %v624 = vld [vmem:[#allocation2 + $0x1c9] sm:$0xff]
        %v625 = vld [vmem:[#allocation2 + $0x1d1] sm:$0xff]
        %v626 = vld [vmem:[#allocation2 + $0x1e9] sm:$0xff]
        %v627 = vld [vmem:[#allocation2 + $0x1f1] sm:$0xff]
        %v628 = vlaneseq
        %v629 = vshrl.u32 %v628, 7
        %v630 = vsub.s32 2, %v629
        %v631 = vrot.slane %v394, %v630
        %v632 = vmul.f32 %v596, %v631
        %v633 = vmul.f32 %v597, %v631
        %v634 = vmul.f32 %v598, %v631
        %v635 = vmul.f32 %v599, %v631
        %v636 = vmul.f32 %v600, %v631
        %v637 = vmul.f32 %v601, %v631
        %v638 = vmul.f32 %v602, %v631
        %v639 = vmul.f32 %v603, %v631
        %v640 = vmul.f32 %v604, %v631
        %v641 = vmul.f32 %v605, %v631
        %v642 = vmul.f32 %v606, %v631
        %v643 = vmul.f32 %v607, %v631
        %v644 = vmul.f32 %v608, %v631
        %v645 = vmul.f32 %v609, %v631
        %v646 = vmul.f32 %v610, %v631
        %v647 = vmul.f32 %v611, %v631
        %v648 = vmul.f32 %v612, %v631
        %v649 = vmul.f32 %v613, %v631
        %v650 = vmul.f32 %v614, %v631
        %v651 = vmul.f32 %v615, %v631
        %v652 = vmul.f32 %v616, %v631
        %v653 = vmul.f32 %v617, %v631
        %v654 = vmul.f32 %v618, %v631
        %v655 = vmul.f32 %v619, %v631
        %v656 = vmul.f32 %v620, %v631
        %v657 = vmul.f32 %v621, %v631
        %v658 = vmul.f32 %v622, %v631
        %v659 = vmul.f32 %v623, %v631
        %v660 = vmul.f32 %v624, %v631
        %v661 = vmul.f32 %v625, %v631
        %v662 = vmul.f32 %v626, %v631
        %v663 = vmul.f32 %v627, %v631
        %v664 = vadd.f32 %v564, %v632
        %v665 = vadd.f32 %v565, %v633
        %v666 = vadd.f32 %v566, %v634
        %v667 = vadd.f32 %v567, %v635
        %v668 = vadd.f32 %v568, %v636
        %v669 = vadd.f32 %v569, %v637
        %v670 = vadd.f32 %v570, %v638
        %v671 = vadd.f32 %v571, %v639
        %v672 = vadd.f32 %v572, %v640
        %v673 = vadd.f32 %v573, %v641
        %v674 = vadd.f32 %v574, %v642
        %v675 = vadd.f32 %v575, %v643
        %v676 = vadd.f32 %v576, %v644
        %v677 = vadd.f32 %v577, %v645
        %v678 = vadd.f32 %v578, %v646
        %v679 = vadd.f32 %v579, %v647
        %v680 = vadd.f32 %v580, %v648
        %v681 = vadd.f32 %v581, %v649
        %v682 = vadd.f32 %v582, %v650
        %v683 = vadd.f32 %v583, %v651
        %v684 = vadd.f32 %v584, %v652
        %v685 = vadd.f32 %v585, %v653
        %v686 = vadd.f32 %v586, %v654
        %v687 = vadd.f32 %v587, %v655
        %v688 = vadd.f32 %v588, %v656
        %v689 = vadd.f32 %v589, %v657
        %v690 = vadd.f32 %v590, %v658
        %v691 = vadd.f32 %v591, %v659
        %v692 = vadd.f32 %v592, %v660
        %v693 = vadd.f32 %v593, %v661
        %v694 = vadd.f32 %v594, %v662
        %v695 = vadd.f32 %v595, %v663
        %v696 = vld [vmem:[%s361 + $0x7] sm:$0xff]
        %v697 = vld [vmem:[%s361 + $0xf] sm:$0xff]
        %v698 = vld [vmem:[%s361 + $0x27] sm:$0xff]
        %v699 = vld [vmem:[%s361 + $0x2f] sm:$0xff]
        %v700 = vld [vmem:[%s361 + $0x47] sm:$0xff]
        %v701 = vld [vmem:[%s361 + $0x4f] sm:$0xff]
        %v702 = vld [vmem:[%s361 + $0x67] sm:$0xff]
        %v703 = vld [vmem:[%s361 + $0x6f] sm:$0xff]
        %v704 = vld [vmem:[%s361 + $0x87] sm:$0xff]
        %v705 = vld [vmem:[%s361 + $0x8f] sm:$0xff]
        %v706 = vld [vmem:[%s361 + $0xa7] sm:$0xff]
        %v707 = vld [vmem:[%s361 + $0xaf] sm:$0xff]
        %v708 = vld [vmem:[%s361 + $0xc7] sm:$0xff]
        %v709 = vld [vmem:[%s361 + $0xcf] sm:$0xff]
        %v710 = vld [vmem:[%s361 + $0xe7] sm:$0xff]
        %v711 = vld [vmem:[%s361 + $0xef] sm:$0xff]
        %v712 = vld [vmem:[%s361 + $0x107] sm:$0xff]
        %v713 = vld [vmem:[%s361 + $0x10f] sm:$0xff]
        %v714 = vld [vmem:[%s361 + $0x127] sm:$0xff]
        %v715 = vld [vmem:[%s361 + $0x12f] sm:$0xff]
        %v716 = vld [vmem:[%s361 + $0x147] sm:$0xff]
        %v717 = vld [vmem:[%s361 + $0x14f] sm:$0xff]
        %v718 = vld [vmem:[%s361 + $0x167] sm:$0xff]
        %v719 = vld [vmem:[%s361 + $0x16f] sm:$0xff]
        %v720 = vld [vmem:[%s361 + $0x187] sm:$0xff]
        %v721 = vld [vmem:[%s361 + $0x18f] sm:$0xff]
        %v722 = vld [vmem:[%s361 + $0x1a7] sm:$0xff]
        %v723 = vld [vmem:[%s361 + $0x1af] sm:$0xff]
        %v724 = vld [vmem:[%s361 + $0x1c7] sm:$0xff]
        %v725 = vld [vmem:[%s361 + $0x1cf] sm:$0xff]
        %v726 = vld [vmem:[%s361 + $0x1e7] sm:$0xff]
        %v727 = vld [vmem:[%s361 + $0x1ef] sm:$0xff]
        %v728 = vlaneseq
        %v729 = vshrl.u32 %v728, 7
        %v730 = vsub.s32 3, %v729
        %v731 = vrot.slane %v394, %v730
        %v732 = vmul.f32 %v696, %v731
        %v733 = vmul.f32 %v697, %v731
        %v734 = vmul.f32 %v698, %v731
        %v735 = vmul.f32 %v699, %v731
        %v736 = vmul.f32 %v700, %v731
        %v737 = vmul.f32 %v701, %v731
        %v738 = vmul.f32 %v702, %v731
        %v739 = vmul.f32 %v703, %v731
        %v740 = vmul.f32 %v704, %v731
        %v741 = vmul.f32 %v705, %v731
        %v742 = vmul.f32 %v706, %v731
        %v743 = vmul.f32 %v707, %v731
        %v744 = vmul.f32 %v708, %v731
        %v745 = vmul.f32 %v709, %v731
        %v746 = vmul.f32 %v710, %v731
        %v747 = vmul.f32 %v711, %v731
        %v748 = vmul.f32 %v712, %v731
        %v749 = vmul.f32 %v713, %v731
        %v750 = vmul.f32 %v714, %v731
        %v751 = vmul.f32 %v715, %v731
        %v752 = vmul.f32 %v716, %v731
        %v753 = vmul.f32 %v717, %v731
        %v754 = vmul.f32 %v718, %v731
        %v755 = vmul.f32 %v719, %v731
        %v756 = vmul.f32 %v720, %v731
        %v757 = vmul.f32 %v721, %v731
        %v758 = vmul.f32 %v722, %v731
        %v759 = vmul.f32 %v723, %v731
        %v760 = vmul.f32 %v724, %v731
        %v761 = vmul.f32 %v725, %v731
        %v762 = vmul.f32 %v726, %v731
        %v763 = vmul.f32 %v727, %v731
        %v764 = vadd.f32 %v664, %v732
        %v765 = vadd.f32 %v665, %v733
        %v766 = vadd.f32 %v666, %v734
        %v767 = vadd.f32 %v667, %v735
        %v768 = vadd.f32 %v668, %v736
        %v769 = vadd.f32 %v669, %v737
        %v770 = vadd.f32 %v670, %v738
        %v771 = vadd.f32 %v671, %v739
        %v772 = vadd.f32 %v672, %v740
        %v773 = vadd.f32 %v673, %v741
        %v774 = vadd.f32 %v674, %v742
        %v775 = vadd.f32 %v675, %v743
        %v776 = vadd.f32 %v676, %v744
        %v777 = vadd.f32 %v677, %v745
        %v778 = vadd.f32 %v678, %v746
        %v779 = vadd.f32 %v679, %v747
        %v780 = vadd.f32 %v680, %v748
        %v781 = vadd.f32 %v681, %v749
        %v782 = vadd.f32 %v682, %v750
        %v783 = vadd.f32 %v683, %v751
        %v784 = vadd.f32 %v684, %v752
        %v785 = vadd.f32 %v685, %v753
        %v786 = vadd.f32 %v686, %v754
        %v787 = vadd.f32 %v687, %v755
        %v788 = vadd.f32 %v688, %v756
        %v789 = vadd.f32 %v689, %v757
        %v790 = vadd.f32 %v690, %v758
        %v791 = vadd.f32 %v691, %v759
        %v792 = vadd.f32 %v692, %v760
        %v793 = vadd.f32 %v693, %v761
        %v794 = vadd.f32 %v694, %v762
        %v795 = vadd.f32 %v695, %v763
        %v796 = vld [vmem:[%s361 + $0x8] sm:$0xff]
        %v797 = vld [vmem:[%s361 + $0x10] sm:$0xff]
        %v798 = vld [vmem:[%s361 + $0x28] sm:$0xff]
        %v799 = vld [vmem:[%s361 + $0x30] sm:$0xff]
        %v800 = vld [vmem:[%s361 + $0x48] sm:$0xff]
        %v801 = vld [vmem:[%s361 + $0x50] sm:$0xff]
        %v802 = vld [vmem:[%s361 + $0x68] sm:$0xff]
        %v803 = vld [vmem:[%s361 + $0x70] sm:$0xff]
        %v804 = vld [vmem:[%s361 + $0x88] sm:$0xff]
        %v805 = vld [vmem:[%s361 + $0x90] sm:$0xff]
        %v806 = vld [vmem:[%s361 + $0xa8] sm:$0xff]
        %v807 = vld [vmem:[%s361 + $0xb0] sm:$0xff]
        %v808 = vld [vmem:[%s361 + $0xc8] sm:$0xff]
        %v809 = vld [vmem:[%s361 + $0xd0] sm:$0xff]
        %v810 = vld [vmem:[%s361 + $0xe8] sm:$0xff]
        %v811 = vld [vmem:[%s361 + $0xf0] sm:$0xff]
        %v812 = vld [vmem:[%s361 + $0x108] sm:$0xff]
        %v813 = vld [vmem:[%s361 + $0x110] sm:$0xff]
        %v814 = vld [vmem:[%s361 + $0x128] sm:$0xff]
        %v815 = vld [vmem:[%s361 + $0x130] sm:$0xff]
        %v816 = vld [vmem:[%s361 + $0x148] sm:$0xff]
        %v817 = vld [vmem:[%s361 + $0x150] sm:$0xff]
        %v818 = vld [vmem:[%s361 + $0x168] sm:$0xff]
        %v819 = vld [vmem:[%s361 + $0x170] sm:$0xff]
        %v820 = vld [vmem:[%s361 + $0x188] sm:$0xff]
        %v821 = vld [vmem:[%s361 + $0x190] sm:$0xff]
        %v822 = vld [vmem:[%s361 + $0x1a8] sm:$0xff]
        %v823 = vld [vmem:[%s361 + $0x1b0] sm:$0xff]
        %v824 = vld [vmem:[%s361 + $0x1c8] sm:$0xff]
        %v825 = vld [vmem:[%s361 + $0x1d0] sm:$0xff]
        %v826 = vld [vmem:[%s361 + $0x1e8] sm:$0xff]
        %v827 = vld [vmem:[%s361 + $0x1f0] sm:$0xff]
        %v828 = vlaneseq
        %v829 = vshrl.u32 %v828, 7
        %v830 = vsub.s32 4, %v829
        %v831 = vrot.slane %v394, %v830
        %v832 = vmul.f32 %v796, %v831
        %v833 = vmul.f32 %v797, %v831
        %v834 = vmul.f32 %v798, %v831
        %v835 = vmul.f32 %v799, %v831
        %v836 = vmul.f32 %v800, %v831
        %v837 = vmul.f32 %v801, %v831
        %v838 = vmul.f32 %v802, %v831
        %v839 = vmul.f32 %v803, %v831
        %v840 = vmul.f32 %v804, %v831
        %v841 = vmul.f32 %v805, %v831
        %v842 = vmul.f32 %v806, %v831
        %v843 = vmul.f32 %v807, %v831
        %v844 = vmul.f32 %v808, %v831
        %v845 = vmul.f32 %v809, %v831
        %v846 = vmul.f32 %v810, %v831
        %v847 = vmul.f32 %v811, %v831
        %v848 = vmul.f32 %v812, %v831
        %v849 = vmul.f32 %v813, %v831
        %v850 = vmul.f32 %v814, %v831
        %v851 = vmul.f32 %v815, %v831
        %v852 = vmul.f32 %v816, %v831
        %v853 = vmul.f32 %v817, %v831
        %v854 = vmul.f32 %v818, %v831
        %v855 = vmul.f32 %v819, %v831
        %v856 = vmul.f32 %v820, %v831
        %v857 = vmul.f32 %v821, %v831
        %v858 = vmul.f32 %v822, %v831
        %v859 = vmul.f32 %v823, %v831
        %v860 = vmul.f32 %v824, %v831
        %v861 = vmul.f32 %v825, %v831
        %v862 = vmul.f32 %v826, %v831
        %v863 = vmul.f32 %v827, %v831
        %v864 = vadd.f32 %v764, %v832
        %v865 = vadd.f32 %v765, %v833
        %v866 = vadd.f32 %v766, %v834
        %v867 = vadd.f32 %v767, %v835
        %v868 = vadd.f32 %v768, %v836
        %v869 = vadd.f32 %v769, %v837
        %v870 = vadd.f32 %v770, %v838
        %v871 = vadd.f32 %v771, %v839
        %v872 = vadd.f32 %v772, %v840
        %v873 = vadd.f32 %v773, %v841
        %v874 = vadd.f32 %v774, %v842
        %v875 = vadd.f32 %v775, %v843
        %v876 = vadd.f32 %v776, %v844
        %v877 = vadd.f32 %v777, %v845
        %v878 = vadd.f32 %v778, %v846
        %v879 = vadd.f32 %v779, %v847
        %v880 = vadd.f32 %v780, %v848
        %v881 = vadd.f32 %v781, %v849
        %v882 = vadd.f32 %v782, %v850
        %v883 = vadd.f32 %v783, %v851
        %v884 = vadd.f32 %v784, %v852
        %v885 = vadd.f32 %v785, %v853
        %v886 = vadd.f32 %v786, %v854
        %v887 = vadd.f32 %v787, %v855
        %v888 = vadd.f32 %v788, %v856
        %v889 = vadd.f32 %v789, %v857
        %v890 = vadd.f32 %v790, %v858
        %v891 = vadd.f32 %v791, %v859
        %v892 = vadd.f32 %v792, %v860
        %v893 = vadd.f32 %v793, %v861
        %v894 = vadd.f32 %v794, %v862
        %v895 = vadd.f32 %v795, %v863
        %v896 = vld [vmem:[%s361 + $0x9] sm:$0xff]
        %v897 = vld [vmem:[%s361 + $0x11] sm:$0xff]
        %v898 = vld [vmem:[%s361 + $0x29] sm:$0xff]
        %v899 = vld [vmem:[%s361 + $0x31] sm:$0xff]
        %v900 = vld [vmem:[%s361 + $0x49] sm:$0xff]
        %v901 = vld [vmem:[%s361 + $0x51] sm:$0xff]
        %v902 = vld [vmem:[%s361 + $0x69] sm:$0xff]
        %v903 = vld [vmem:[%s361 + $0x71] sm:$0xff]
        %v904 = vld [vmem:[%s361 + $0x89] sm:$0xff]
        %v905 = vld [vmem:[%s361 + $0x91] sm:$0xff]
        %v906 = vld [vmem:[%s361 + $0xa9] sm:$0xff]
        %v907 = vld [vmem:[%s361 + $0xb1] sm:$0xff]
        %v908 = vld [vmem:[%s361 + $0xc9] sm:$0xff]
        %v909 = vld [vmem:[%s361 + $0xd1] sm:$0xff]
        %v910 = vld [vmem:[%s361 + $0xe9] sm:$0xff]
        %v911 = vld [vmem:[%s361 + $0xf1] sm:$0xff]
        %v912 = vld [vmem:[%s361 + $0x109] sm:$0xff]
        %v913 = vld [vmem:[%s361 + $0x111] sm:$0xff]
        %v914 = vld [vmem:[%s361 + $0x129] sm:$0xff]
        %v915 = vld [vmem:[%s361 + $0x131] sm:$0xff]
        %v916 = vld [vmem:[%s361 + $0x149] sm:$0xff]
        %v917 = vld [vmem:[%s361 + $0x151] sm:$0xff]
        %v918 = vld [vmem:[%s361 + $0x169] sm:$0xff]
        %v919 = vld [vmem:[%s361 + $0x171] sm:$0xff]
        %v920 = vld [vmem:[%s361 + $0x189] sm:$0xff]
        %v921 = vld [vmem:[%s361 + $0x191] sm:$0xff]
        %v922 = vld [vmem:[%s361 + $0x1a9] sm:$0xff]
        %v923 = vld [vmem:[%s361 + $0x1b1] sm:$0xff]
        %v924 = vld [vmem:[%s361 + $0x1c9] sm:$0xff]
        %v925 = vld [vmem:[%s361 + $0x1d1] sm:$0xff]
        %v926 = vld [vmem:[%s361 + $0x1e9] sm:$0xff]
        %v927 = vld [vmem:[%s361 + $0x1f1] sm:$0xff]
        %v928 = vlaneseq
        %v929 = vshrl.u32 %v928, 7
        %v930 = vsub.s32 5, %v929
        %v931 = vrot.slane %v394, %v930
        %v932 = vmul.f32 %v896, %v931
        %v933 = vmul.f32 %v897, %v931
        %v934 = vmul.f32 %v898, %v931
        %v935 = vmul.f32 %v899, %v931
        %v936 = vmul.f32 %v900, %v931
        %v937 = vmul.f32 %v901, %v931
        %v938 = vmul.f32 %v902, %v931
        %v939 = vmul.f32 %v903, %v931
        %v940 = vmul.f32 %v904, %v931
        %v941 = vmul.f32 %v905, %v931
        %v942 = vmul.f32 %v906, %v931
        %v943 = vmul.f32 %v907, %v931
        %v944 = vmul.f32 %v908, %v931
        %v945 = vmul.f32 %v909, %v931
        %v946 = vmul.f32 %v910, %v931
        %v947 = vmul.f32 %v911, %v931
        %v948 = vmul.f32 %v912, %v931
        %v949 = vmul.f32 %v913, %v931
        %v950 = vmul.f32 %v914, %v931
        %v951 = vmul.f32 %v915, %v931
        %v952 = vmul.f32 %v916, %v931
        %v953 = vmul.f32 %v917, %v931
        %v954 = vmul.f32 %v918, %v931
        %v955 = vmul.f32 %v919, %v931
        %v956 = vmul.f32 %v920, %v931
        %v957 = vmul.f32 %v921, %v931
        %v958 = vmul.f32 %v922, %v931
        %v959 = vmul.f32 %v923, %v931
        %v960 = vmul.f32 %v924, %v931
        %v961 = vmul.f32 %v925, %v931
        %v962 = vmul.f32 %v926, %v931
        %v963 = vmul.f32 %v927, %v931
        %v964 = vadd.f32 %v864, %v932
        %v965 = vadd.f32 %v865, %v933
        %v966 = vadd.f32 %v866, %v934
        %v967 = vadd.f32 %v867, %v935
        %v968 = vadd.f32 %v868, %v936
        %v969 = vadd.f32 %v869, %v937
        %v970 = vadd.f32 %v870, %v938
        %v971 = vadd.f32 %v871, %v939
        %v972 = vadd.f32 %v872, %v940
        %v973 = vadd.f32 %v873, %v941
        %v974 = vadd.f32 %v874, %v942
        %v975 = vadd.f32 %v875, %v943
        %v976 = vadd.f32 %v876, %v944
        %v977 = vadd.f32 %v877, %v945
        %v978 = vadd.f32 %v878, %v946
        %v979 = vadd.f32 %v879, %v947
        %v980 = vadd.f32 %v880, %v948
        %v981 = vadd.f32 %v881, %v949
        %v982 = vadd.f32 %v882, %v950
        %v983 = vadd.f32 %v883, %v951
        %v984 = vadd.f32 %v884, %v952
        %v985 = vadd.f32 %v885, %v953
        %v986 = vadd.f32 %v886, %v954
        %v987 = vadd.f32 %v887, %v955
        %v988 = vadd.f32 %v888, %v956
        %v989 = vadd.f32 %v889, %v957
        %v990 = vadd.f32 %v890, %v958
        %v991 = vadd.f32 %v891, %v959
        %v992 = vadd.f32 %v892, %v960
        %v993 = vadd.f32 %v893, %v961
        %v994 = vadd.f32 %v894, %v962
        %v995 = vadd.f32 %v895, %v963
        %s996 = scalar_lea.vmem [#allocation2], 64
        %v997 = vld [vmem:[%s996 + $0x7] sm:$0xff]
        %v998 = vld [vmem:[%s996 + $0xf] sm:$0xff]
        %v999 = vld [vmem:[%s996 + $0x27] sm:$0xff]
        %v1000 = vld [vmem:[%s996 + $0x2f] sm:$0xff]
        %v1001 = vld [vmem:[%s996 + $0x47] sm:$0xff]
        %v1002 = vld [vmem:[%s996 + $0x4f] sm:$0xff]
        %v1003 = vld [vmem:[%s996 + $0x67] sm:$0xff]
        %v1004 = vld [vmem:[%s996 + $0x6f] sm:$0xff]
        %v1005 = vld [vmem:[%s996 + $0x87] sm:$0xff]
        %v1006 = vld [vmem:[%s996 + $0x8f] sm:$0xff]
        %v1007 = vld [vmem:[%s996 + $0xa7] sm:$0xff]
        %v1008 = vld [vmem:[%s996 + $0xaf] sm:$0xff]
        %v1009 = vld [vmem:[%s996 + $0xc7] sm:$0xff]
        %v1010 = vld [vmem:[%s996 + $0xcf] sm:$0xff]
        %v1011 = vld [vmem:[%s996 + $0xe7] sm:$0xff]
        %v1012 = vld [vmem:[%s996 + $0xef] sm:$0xff]
        %v1013 = vld [vmem:[%s996 + $0x107] sm:$0xff]
        %v1014 = vld [vmem:[%s996 + $0x10f] sm:$0xff]
        %v1015 = vld [vmem:[%s996 + $0x127] sm:$0xff]
        %v1016 = vld [vmem:[%s996 + $0x12f] sm:$0xff]
        %v1017 = vld [vmem:[%s996 + $0x147] sm:$0xff]
        %v1018 = vld [vmem:[%s996 + $0x14f] sm:$0xff]
        %v1019 = vld [vmem:[%s996 + $0x167] sm:$0xff]
        %v1020 = vld [vmem:[%s996 + $0x16f] sm:$0xff]
        %v1021 = vld [vmem:[%s996 + $0x187] sm:$0xff]
        %v1022 = vld [vmem:[%s996 + $0x18f] sm:$0xff]
        %v1023 = vld [vmem:[%s996 + $0x1a7] sm:$0xff]
        %v1024 = vld [vmem:[%s996 + $0x1af] sm:$0xff]
        %v1025 = vld [vmem:[%s996 + $0x1c7] sm:$0xff]
        %v1026 = vld [vmem:[%s996 + $0x1cf] sm:$0xff]
        %v1027 = vld [vmem:[%s996 + $0x1e7] sm:$0xff]
        %v1028 = vld [vmem:[%s996 + $0x1ef] sm:$0xff]
        %v1029 = vlaneseq
        %v1030 = vshrl.u32 %v1029, 7
        %v1031 = vsub.s32 6, %v1030
        %v1032 = vrot.slane %v394, %v1031
        %v1033 = vmul.f32 %v997, %v1032
        %v1034 = vmul.f32 %v998, %v1032
        %v1035 = vmul.f32 %v999, %v1032
        %v1036 = vmul.f32 %v1000, %v1032
        %v1037 = vmul.f32 %v1001, %v1032
        %v1038 = vmul.f32 %v1002, %v1032
        %v1039 = vmul.f32 %v1003, %v1032
        %v1040 = vmul.f32 %v1004, %v1032
        %v1041 = vmul.f32 %v1005, %v1032
        %v1042 = vmul.f32 %v1006, %v1032
        %v1043 = vmul.f32 %v1007, %v1032
        %v1044 = vmul.f32 %v1008, %v1032
        %v1045 = vmul.f32 %v1009, %v1032
        %v1046 = vmul.f32 %v1010, %v1032
        %v1047 = vmul.f32 %v1011, %v1032
        %v1048 = vmul.f32 %v1012, %v1032
        %v1049 = vmul.f32 %v1013, %v1032
        %v1050 = vmul.f32 %v1014, %v1032
        %v1051 = vmul.f32 %v1015, %v1032
        %v1052 = vmul.f32 %v1016, %v1032
        %v1053 = vmul.f32 %v1017, %v1032
        %v1054 = vmul.f32 %v1018, %v1032
        %v1055 = vmul.f32 %v1019, %v1032
        %v1056 = vmul.f32 %v1020, %v1032
        %v1057 = vmul.f32 %v1021, %v1032
        %v1058 = vmul.f32 %v1022, %v1032
        %v1059 = vmul.f32 %v1023, %v1032
        %v1060 = vmul.f32 %v1024, %v1032
        %v1061 = vmul.f32 %v1025, %v1032
        %v1062 = vmul.f32 %v1026, %v1032
        %v1063 = vmul.f32 %v1027, %v1032
        %v1064 = vmul.f32 %v1028, %v1032
        %v1065 = vadd.f32 %v964, %v1033
        %v1066 = vadd.f32 %v965, %v1034
        %v1067 = vadd.f32 %v966, %v1035
        %v1068 = vadd.f32 %v967, %v1036
        %v1069 = vadd.f32 %v968, %v1037
        %v1070 = vadd.f32 %v969, %v1038
        %v1071 = vadd.f32 %v970, %v1039
        %v1072 = vadd.f32 %v971, %v1040
        %v1073 = vadd.f32 %v972, %v1041
        %v1074 = vadd.f32 %v973, %v1042
        %v1075 = vadd.f32 %v974, %v1043
        %v1076 = vadd.f32 %v975, %v1044
        %v1077 = vadd.f32 %v976, %v1045
        %v1078 = vadd.f32 %v977, %v1046
        %v1079 = vadd.f32 %v978, %v1047
        %v1080 = vadd.f32 %v979, %v1048
        %v1081 = vadd.f32 %v980, %v1049
        %v1082 = vadd.f32 %v981, %v1050
        %v1083 = vadd.f32 %v982, %v1051
        %v1084 = vadd.f32 %v983, %v1052
        %v1085 = vadd.f32 %v984, %v1053
        %v1086 = vadd.f32 %v985, %v1054
        %v1087 = vadd.f32 %v986, %v1055
        %v1088 = vadd.f32 %v987, %v1056
        %v1089 = vadd.f32 %v988, %v1057
        %v1090 = vadd.f32 %v989, %v1058
        %v1091 = vadd.f32 %v990, %v1059
        %v1092 = vadd.f32 %v991, %v1060
        %v1093 = vadd.f32 %v992, %v1061
        %v1094 = vadd.f32 %v993, %v1062
        %v1095 = vadd.f32 %v994, %v1063
        %v1096 = vadd.f32 %v995, %v1064
        %v1097 = vld [vmem:[%s996 + $0x8] sm:$0xff]
        %v1098 = vld [vmem:[%s996 + $0x10] sm:$0xff]
        %v1099 = vld [vmem:[%s996 + $0x28] sm:$0xff]
        %v1100 = vld [vmem:[%s996 + $0x30] sm:$0xff]
        %v1101 = vld [vmem:[%s996 + $0x48] sm:$0xff]
        %v1102 = vld [vmem:[%s996 + $0x50] sm:$0xff]
        %v1103 = vld [vmem:[%s996 + $0x68] sm:$0xff]
        %v1104 = vld [vmem:[%s996 + $0x70] sm:$0xff]
        %v1105 = vld [vmem:[%s996 + $0x88] sm:$0xff]
        %v1106 = vld [vmem:[%s996 + $0x90] sm:$0xff]
        %v1107 = vld [vmem:[%s996 + $0xa8] sm:$0xff]
        %v1108 = vld [vmem:[%s996 + $0xb0] sm:$0xff]
        %v1109 = vld [vmem:[%s996 + $0xc8] sm:$0xff]
        %v1110 = vld [vmem:[%s996 + $0xd0] sm:$0xff]
        %v1111 = vld [vmem:[%s996 + $0xe8] sm:$0xff]
        %v1112 = vld [vmem:[%s996 + $0xf0] sm:$0xff]
        %v1113 = vld [vmem:[%s996 + $0x108] sm:$0xff]
        %v1114 = vld [vmem:[%s996 + $0x110] sm:$0xff]
        %v1115 = vld [vmem:[%s996 + $0x128] sm:$0xff]
        %v1116 = vld [vmem:[%s996 + $0x130] sm:$0xff]
        %v1117 = vld [vmem:[%s996 + $0x148] sm:$0xff]
        %v1118 = vld [vmem:[%s996 + $0x150] sm:$0xff]
        %v1119 = vld [vmem:[%s996 + $0x168] sm:$0xff]
        %v1120 = vld [vmem:[%s996 + $0x170] sm:$0xff]
        %v1121 = vld [vmem:[%s996 + $0x188] sm:$0xff]
        %v1122 = vld [vmem:[%s996 + $0x190] sm:$0xff]
        %v1123 = vld [vmem:[%s996 + $0x1a8] sm:$0xff]
        %v1124 = vld [vmem:[%s996 + $0x1b0] sm:$0xff]
        %v1125 = vld [vmem:[%s996 + $0x1c8] sm:$0xff]
        %v1126 = vld [vmem:[%s996 + $0x1d0] sm:$0xff]
        %v1127 = vld [vmem:[%s996 + $0x1e8] sm:$0xff]
        %v1128 = vld [vmem:[%s996 + $0x1f0] sm:$0xff]
        %v1129 = vlaneseq
        %v1130 = vshrl.u32 %v1129, 7
        %v1131 = vsub.s32 7, %v1130
        %v1132 = vrot.slane %v394, %v1131
        %v1133 = vmul.f32 %v1097, %v1132
        %v1134 = vmul.f32 %v1098, %v1132
        %v1135 = vmul.f32 %v1099, %v1132
        %v1136 = vmul.f32 %v1100, %v1132
        %v1137 = vmul.f32 %v1101, %v1132
        %v1138 = vmul.f32 %v1102, %v1132
        %v1139 = vmul.f32 %v1103, %v1132
        %v1140 = vmul.f32 %v1104, %v1132
        %v1141 = vmul.f32 %v1105, %v1132
        %v1142 = vmul.f32 %v1106, %v1132
        %v1143 = vmul.f32 %v1107, %v1132
        %v1144 = vmul.f32 %v1108, %v1132
        %v1145 = vmul.f32 %v1109, %v1132
        %v1146 = vmul.f32 %v1110, %v1132
        %v1147 = vmul.f32 %v1111, %v1132
        %v1148 = vmul.f32 %v1112, %v1132
        %v1149 = vmul.f32 %v1113, %v1132
        %v1150 = vmul.f32 %v1114, %v1132
        %v1151 = vmul.f32 %v1115, %v1132
        %v1152 = vmul.f32 %v1116, %v1132
        %v1153 = vmul.f32 %v1117, %v1132
        %v1154 = vmul.f32 %v1118, %v1132
        %v1155 = vmul.f32 %v1119, %v1132
        %v1156 = vmul.f32 %v1120, %v1132
        %v1157 = vmul.f32 %v1121, %v1132
        %v1158 = vmul.f32 %v1122, %v1132
        %v1159 = vmul.f32 %v1123, %v1132
        %v1160 = vmul.f32 %v1124, %v1132
        %v1161 = vmul.f32 %v1125, %v1132
        %v1162 = vmul.f32 %v1126, %v1132
        %v1163 = vmul.f32 %v1127, %v1132
        %v1164 = vmul.f32 %v1128, %v1132
        %v1165 = vadd.f32 %v1065, %v1133
        %v1166 = vadd.f32 %v1066, %v1134
        %v1167 = vadd.f32 %v1067, %v1135
        %v1168 = vadd.f32 %v1068, %v1136
        %v1169 = vadd.f32 %v1069, %v1137
        %v1170 = vadd.f32 %v1070, %v1138
        %v1171 = vadd.f32 %v1071, %v1139
        %v1172 = vadd.f32 %v1072, %v1140
        %v1173 = vadd.f32 %v1073, %v1141
        %v1174 = vadd.f32 %v1074, %v1142
        %v1175 = vadd.f32 %v1075, %v1143
        %v1176 = vadd.f32 %v1076, %v1144
        %v1177 = vadd.f32 %v1077, %v1145
        %v1178 = vadd.f32 %v1078, %v1146
        %v1179 = vadd.f32 %v1079, %v1147
        %v1180 = vadd.f32 %v1080, %v1148
        %v1181 = vadd.f32 %v1081, %v1149
        %v1182 = vadd.f32 %v1082, %v1150
        %v1183 = vadd.f32 %v1083, %v1151
        %v1184 = vadd.f32 %v1084, %v1152
        %v1185 = vadd.f32 %v1085, %v1153
        %v1186 = vadd.f32 %v1086, %v1154
        %v1187 = vadd.f32 %v1087, %v1155
        %v1188 = vadd.f32 %v1088, %v1156
        %v1189 = vadd.f32 %v1089, %v1157
        %v1190 = vadd.f32 %v1090, %v1158
        %v1191 = vadd.f32 %v1091, %v1159
        %v1192 = vadd.f32 %v1092, %v1160
        %v1193 = vadd.f32 %v1093, %v1161
        %v1194 = vadd.f32 %v1094, %v1162
        %v1195 = vadd.f32 %v1095, %v1163
        %v1196 = vadd.f32 %v1096, %v1164
        %v1197 = vld [vmem:[%s996 + $0x9] sm:$0xff]
        %v1198 = vld [vmem:[%s996 + $0x11] sm:$0xff]
        %v1199 = vld [vmem:[%s996 + $0x29] sm:$0xff]
        %v1200 = vld [vmem:[%s996 + $0x31] sm:$0xff]
        %v1201 = vld [vmem:[%s996 + $0x49] sm:$0xff]
        %v1202 = vld [vmem:[%s996 + $0x51] sm:$0xff]
        %v1203 = vld [vmem:[%s996 + $0x69] sm:$0xff]
        %v1204 = vld [vmem:[%s996 + $0x71] sm:$0xff]
        %v1205 = vld [vmem:[%s996 + $0x89] sm:$0xff]
        %v1206 = vld [vmem:[%s996 + $0x91] sm:$0xff]
        %v1207 = vld [vmem:[%s996 + $0xa9] sm:$0xff]
        %v1208 = vld [vmem:[%s996 + $0xb1] sm:$0xff]
        %v1209 = vld [vmem:[%s996 + $0xc9] sm:$0xff]
        %v1210 = vld [vmem:[%s996 + $0xd1] sm:$0xff]
        %v1211 = vld [vmem:[%s996 + $0xe9] sm:$0xff]
        %v1212 = vld [vmem:[%s996 + $0xf1] sm:$0xff]
        %v1213 = vld [vmem:[%s996 + $0x109] sm:$0xff]
        %v1214 = vld [vmem:[%s996 + $0x111] sm:$0xff]
        %v1215 = vld [vmem:[%s996 + $0x129] sm:$0xff]
        %v1216 = vld [vmem:[%s996 + $0x131] sm:$0xff]
        %v1217 = vld [vmem:[%s996 + $0x149] sm:$0xff]
        %v1218 = vld [vmem:[%s996 + $0x151] sm:$0xff]
        %v1219 = vld [vmem:[%s996 + $0x169] sm:$0xff]
        %v1220 = vld [vmem:[%s996 + $0x171] sm:$0xff]
        %v1221 = vld [vmem:[%s996 + $0x189] sm:$0xff]
        %v1222 = vld [vmem:[%s996 + $0x191] sm:$0xff]
        %v1223 = vld [vmem:[%s996 + $0x1a9] sm:$0xff]
        %v1224 = vld [vmem:[%s996 + $0x1b1] sm:$0xff]
        %v1225 = vld [vmem:[%s996 + $0x1c9] sm:$0xff]
        %v1226 = vld [vmem:[%s996 + $0x1d1] sm:$0xff]
        %v1227 = vld [vmem:[%s996 + $0x1e9] sm:$0xff]
        %v1228 = vld [vmem:[%s996 + $0x1f1] sm:$0xff]
        %v1229 = vlaneseq
        %v1230 = vshrl.u32 %v1229, 7
        %v1231 = vsub.s32 0, %v1230
        %v1232 = vrot.slane %v395, %v1231
        %v1233 = vmul.f32 %v1197, %v1232
        %v1234 = vmul.f32 %v1198, %v1232
        %v1235 = vmul.f32 %v1199, %v1232
        %v1236 = vmul.f32 %v1200, %v1232
        %v1237 = vmul.f32 %v1201, %v1232
        %v1238 = vmul.f32 %v1202, %v1232
        %v1239 = vmul.f32 %v1203, %v1232
        %v1240 = vmul.f32 %v1204, %v1232
        %v1241 = vmul.f32 %v1205, %v1232
        %v1242 = vmul.f32 %v1206, %v1232
        %v1243 = vmul.f32 %v1207, %v1232
        %v1244 = vmul.f32 %v1208, %v1232
        %v1245 = vmul.f32 %v1209, %v1232
        %v1246 = vmul.f32 %v1210, %v1232
        %v1247 = vmul.f32 %v1211, %v1232
        %v1248 = vmul.f32 %v1212, %v1232
        %v1249 = vmul.f32 %v1213, %v1232
        %v1250 = vmul.f32 %v1214, %v1232
        %v1251 = vmul.f32 %v1215, %v1232
        %v1252 = vmul.f32 %v1216, %v1232
        %v1253 = vmul.f32 %v1217, %v1232
        %v1254 = vmul.f32 %v1218, %v1232
        %v1255 = vmul.f32 %v1219, %v1232
        %v1256 = vmul.f32 %v1220, %v1232
        %v1257 = vmul.f32 %v1221, %v1232
        %v1258 = vmul.f32 %v1222, %v1232
        %v1259 = vmul.f32 %v1223, %v1232
        %v1260 = vmul.f32 %v1224, %v1232
        %v1261 = vmul.f32 %v1225, %v1232
        %v1262 = vmul.f32 %v1226, %v1232
        %v1263 = vmul.f32 %v1227, %v1232
        %v1264 = vmul.f32 %v1228, %v1232
        %v1265 = vadd.f32 %v1165, %v1233
        %v1266 = vadd.f32 %v1166, %v1234
        %v1267 = vadd.f32 %v1167, %v1235
        %v1268 = vadd.f32 %v1168, %v1236
        %v1269 = vadd.f32 %v1169, %v1237
        %v1270 = vadd.f32 %v1170, %v1238
        %v1271 = vadd.f32 %v1171, %v1239
        %v1272 = vadd.f32 %v1172, %v1240
        %v1273 = vadd.f32 %v1173, %v1241
        %v1274 = vadd.f32 %v1174, %v1242
        %v1275 = vadd.f32 %v1175, %v1243
        %v1276 = vadd.f32 %v1176, %v1244
        %v1277 = vadd.f32 %v1177, %v1245
        %v1278 = vadd.f32 %v1178, %v1246
        %v1279 = vadd.f32 %v1179, %v1247
        %v1280 = vadd.f32 %v1180, %v1248
        %v1281 = vadd.f32 %v1181, %v1249
        %v1282 = vadd.f32 %v1182, %v1250
        %v1283 = vadd.f32 %v1183, %v1251
        %v1284 = vadd.f32 %v1184, %v1252
        %v1285 = vadd.f32 %v1185, %v1253
        %v1286 = vadd.f32 %v1186, %v1254
        %v1287 = vadd.f32 %v1187, %v1255
        %v1288 = vadd.f32 %v1188, %v1256
        %v1289 = vadd.f32 %v1189, %v1257
        %v1290 = vadd.f32 %v1190, %v1258
        %v1291 = vadd.f32 %v1191, %v1259
        %v1292 = vadd.f32 %v1192, %v1260
        %v1293 = vadd.f32 %v1193, %v1261
        %v1294 = vadd.f32 %v1194, %v1262
        %v1295 = vadd.f32 %v1195, %v1263
        %v1296 = vadd.f32 %v1196, %v1264
        %v1297 = vld [vmem:[%s2] sm:$0x1]
        %v1299 = vlaneseq
        %v1300 = vshrl.u32 %v1299, 7
        %v1301 = vsub.s32 0, %v1300
        %v1302 = vrot.slane %v1297, %v1301
        %v1304 = vadd.f32 %v1265, %v1302
        %v1305 = vadd.f32 %v1266, %v1302
        %v1306 = vadd.f32 %v1267, %v1302
        %v1307 = vadd.f32 %v1268, %v1302
        %v1308 = vadd.f32 %v1269, %v1302
        %v1309 = vadd.f32 %v1270, %v1302
        %v1310 = vadd.f32 %v1271, %v1302
        %v1311 = vadd.f32 %v1272, %v1302
        %v1312 = vadd.f32 %v1273, %v1302
        %v1313 = vadd.f32 %v1274, %v1302
        %v1314 = vadd.f32 %v1275, %v1302
        %v1315 = vadd.f32 %v1276, %v1302
        %v1316 = vadd.f32 %v1277, %v1302
        %v1317 = vadd.f32 %v1278, %v1302
        %v1318 = vadd.f32 %v1279, %v1302
        %v1319 = vadd.f32 %v1280, %v1302
        %v1320 = vadd.f32 %v1281, %v1302
        %v1321 = vadd.f32 %v1282, %v1302
        %v1322 = vadd.f32 %v1283, %v1302
        %v1323 = vadd.f32 %v1284, %v1302
        %v1324 = vadd.f32 %v1285, %v1302
        %v1325 = vadd.f32 %v1286, %v1302
        %v1326 = vadd.f32 %v1287, %v1302
        %v1327 = vadd.f32 %v1288, %v1302
        %v1328 = vadd.f32 %v1289, %v1302
        %v1329 = vadd.f32 %v1290, %v1302
        %v1330 = vadd.f32 %v1291, %v1302
        %v1331 = vadd.f32 %v1292, %v1302
        %v1332 = vadd.f32 %v1293, %v1302
        %v1333 = vadd.f32 %v1294, %v1302
        %v1334 = vadd.f32 %v1295, %v1302
        %v1335 = vadd.f32 %v1296, %v1302
        %v1336 = vmax.f32 %v1304, 0.0
        %v1337 = vmax.f32 %v1305, 0.0
        %v1338 = vmax.f32 %v1306, 0.0
        %v1339 = vmax.f32 %v1307, 0.0
        %v1340 = vmax.f32 %v1308, 0.0
        %v1341 = vmax.f32 %v1309, 0.0
        %v1342 = vmax.f32 %v1310, 0.0
        %v1343 = vmax.f32 %v1311, 0.0
        %v1344 = vmax.f32 %v1312, 0.0
        %v1345 = vmax.f32 %v1313, 0.0
        %v1346 = vmax.f32 %v1314, 0.0
        %v1347 = vmax.f32 %v1315, 0.0
        %v1348 = vmax.f32 %v1316, 0.0
        %v1349 = vmax.f32 %v1317, 0.0
        %v1350 = vmax.f32 %v1318, 0.0
        %v1351 = vmax.f32 %v1319, 0.0
        %v1352 = vmax.f32 %v1320, 0.0
        %v1353 = vmax.f32 %v1321, 0.0
        %v1354 = vmax.f32 %v1322, 0.0
        %v1355 = vmax.f32 %v1323, 0.0
        %v1356 = vmax.f32 %v1324, 0.0
        %v1357 = vmax.f32 %v1325, 0.0
        %v1358 = vmax.f32 %v1326, 0.0
        %v1359 = vmax.f32 %v1327, 0.0
        %v1360 = vmax.f32 %v1328, 0.0
        %v1361 = vmax.f32 %v1329, 0.0
        %v1362 = vmax.f32 %v1330, 0.0
        %v1363 = vmax.f32 %v1331, 0.0
        %v1364 = vmax.f32 %v1332, 0.0
        %v1365 = vmax.f32 %v1333, 0.0
        %v1366 = vmax.f32 %v1334, 0.0
        %v1367 = vmax.f32 %v1335, 0.0
        %v1368 = vmin.f32 %v1336, 6.0
        %v1369 = vmin.f32 %v1337, 6.0
        %v1370 = vmin.f32 %v1338, 6.0
        %v1371 = vmin.f32 %v1339, 6.0
        %v1372 = vmin.f32 %v1340, 6.0
        %v1373 = vmin.f32 %v1341, 6.0
        %v1374 = vmin.f32 %v1342, 6.0
        %v1375 = vmin.f32 %v1343, 6.0
        %v1376 = vmin.f32 %v1344, 6.0
        %v1377 = vmin.f32 %v1345, 6.0
        %v1378 = vmin.f32 %v1346, 6.0
        %v1379 = vmin.f32 %v1347, 6.0
        %v1380 = vmin.f32 %v1348, 6.0
        %v1381 = vmin.f32 %v1349, 6.0
        %v1382 = vmin.f32 %v1350, 6.0
        %v1383 = vmin.f32 %v1351, 6.0
        %v1384 = vmin.f32 %v1352, 6.0
        %v1385 = vmin.f32 %v1353, 6.0
        %v1386 = vmin.f32 %v1354, 6.0
        %v1387 = vmin.f32 %v1355, 6.0
        %v1388 = vmin.f32 %v1356, 6.0
        %v1389 = vmin.f32 %v1357, 6.0
        %v1390 = vmin.f32 %v1358, 6.0
        %v1391 = vmin.f32 %v1359, 6.0
        %v1392 = vmin.f32 %v1360, 6.0
        %v1393 = vmin.f32 %v1361, 6.0
        %v1394 = vmin.f32 %v1362, 6.0
        %v1395 = vmin.f32 %v1363, 6.0
        %v1396 = vmin.f32 %v1364, 6.0
        %v1397 = vmin.f32 %v1365, 6.0
        %v1398 = vmin.f32 %v1366, 6.0
        %v1399 = vmin.f32 %v1367, 6.0
        %v1400 = vpack.c.bf16 %v1369, %v1368
        %v1401 = vpack.c.bf16 %v1371, %v1370
        %v1402 = vpack.c.bf16 %v1373, %v1372
        %v1403 = vpack.c.bf16 %v1375, %v1374
        %v1404 = vpack.c.bf16 %v1377, %v1376
        %v1405 = vpack.c.bf16 %v1379, %v1378
        %v1406 = vpack.c.bf16 %v1381, %v1380
        %v1407 = vpack.c.bf16 %v1383, %v1382
        %v1408 = vpack.c.bf16 %v1385, %v1384
        %v1409 = vpack.c.bf16 %v1387, %v1386
        %v1410 = vpack.c.bf16 %v1389, %v1388
        %v1411 = vpack.c.bf16 %v1391, %v1390
        %v1412 = vpack.c.bf16 %v1393, %v1392
        %v1413 = vpack.c.bf16 %v1395, %v1394
        %v1414 = vpack.c.bf16 %v1397, %v1396
        %v1415 = vpack.c.bf16 %v1399, %v1398
        %v1416 = vld [vmem:[%s3] sm:$0xf]
        %v1417 = vld [vmem:[%s3 + $0x4] sm:$0xf]
        %v1418 = vld [vmem:[%s3 + $0x8] sm:$0xf]
        %v1419 = vld [vmem:[%s3 + $0xc] sm:$0xf]
        %v1420 = vld [vmem:[%s3 + $0x10] sm:$0xf]
        %v1421 = vld [vmem:[%s3 + $0x14] sm:$0xf]
        %v1422 = vld [vmem:[%s3 + $0x18] sm:$0xf]
        %v1423 = vld [vmem:[%s3 + $0x1c] sm:$0xf]
        %v1424 = vld [vmem:[%s4] sm:$0x1]
        %v1426 = vlaneseq
        %v1427 = vshrl.u32 %v1426, 7
        %v1428 = vsub.s32 0, %v1427
        %v1429 = vrot.slane %v1424, %v1428
        %v1439 = vunpack.c.l.b16 %v1416
        %v1440 = vunpack.c.l.b16 %v1417
        %v1441 = vunpack.c.l.b16 %v1418
        %v1442 = vunpack.c.l.b16 %v1419
        %v1443 = vunpack.c.l.b16 %v1420
        %v1444 = vunpack.c.l.b16 %v1421
        %v1445 = vunpack.c.l.b16 %v1422
        %v1446 = vunpack.c.l.b16 %v1423
        %v1447 = vpack.c.b16 %v1440, %v1439
        %v1448 = vpack.c.b16 %v1442, %v1441
        %v1449 = vpack.c.b16 %v1444, %v1443
        %v1450 = vpack.c.b16 %v1446, %v1445
        %v1456 = vsel %vm224, %v1400, 0
        %v1459 = vsel %vm224, %v1401, 0
        %v1462 = vsel %vm224, %v1402, 0
        %v1465 = vsel %vm224, %v1403, 0
        %v1468 = vsel %vm224, %v1404, 0
        %v1471 = vsel %vm224, %v1405, 0
        %v1474 = vsel %vm224, %v1406, 0
        %v1477 = vsel %vm224, %v1407, 0
        %v1480 = vsel %vm224, %v1408, 0
        %v1483 = vsel %vm224, %v1409, 0
        %v1486 = vsel %vm224, %v1410, 0
        %v1489 = vsel %vm224, %v1411, 0
        %v1492 = vsel %vm224, %v1412, 0
        %v1495 = vsel %vm224, %v1413, 0
        %v1498 = vsel %vm224, %v1414, 0
        %v1501 = vsel %vm224, %v1415, 0
        %1503 = vmatprep.subr.bf16.mxu0 0
        %1504 = vmatpush1.bf16.msra.mxu0 %v1447
        %1505 = vmatprep.subr.bf16.mxu0 0
        %1506 = vmatpush1.bf16.msra.mxu0 %v1448
        %1507 = vmatprep.subr.bf16.mxu0 0
        %1508 = vmatpush1.bf16.msra.mxu0 %v1449
        %1509 = vmatprep.subr.bf16.mxu0 0
        %1510 = vmatpush1.bf16.msra.mxu0 %v1450
        %1511 = vmatprep.subr.bf16.mxu0 0
        %1512 = vmatpush1.bf16.msra.mxu0 0
        %1513 = vmatprep.subr.bf16.mxu0 0
        %1514 = vmatpush1.bf16.msra.mxu0 0
        %1515 = vmatprep.subr.bf16.mxu0 0
        %1516 = vmatpush1.bf16.msra.mxu0 0
        %1517 = vmatprep.subr.bf16.mxu0 0
        %1518 = vmatpush1.bf16.msra.mxu0 0
        %1519 = vmatprep.subr.bf16.mxu0 0
        %1520 = vmatpush1.bf16.msra.mxu0 0
        %1521 = vmatprep.subr.bf16.mxu0 0
        %1522 = vmatpush1.bf16.msra.mxu0 0
        %1523 = vmatprep.subr.bf16.mxu0 0
        %1524 = vmatpush1.bf16.msra.mxu0 0
        %1525 = vmatprep.subr.bf16.mxu0 0
        %1526 = vmatpush1.bf16.msra.mxu0 0
        %1527 = vmatprep.subr.bf16.mxu0 0
        %1528 = vmatpush1.bf16.msra.mxu0 0
        %1529 = vmatprep.subr.bf16.mxu0 0
        %1530 = vmatpush1.bf16.msra.mxu0 0
        %1531 = vmatprep.subr.bf16.mxu0 0
        %1532 = vmatpush1.bf16.msra.mxu0 0
        %1533 = vmatprep.subr.bf16.mxu0 0
        %1534 = vmatpush1.bf16.msra.mxu0 0
        %1535 = vmatprep.mubr.bf16.mxu0 0
        %1536 = vmatmul.mubr.bf16.gmra.mrb[0].mxu0 %v1456
        %v1537 = vpop.f32.mrb[0].mxu0
        %v1538 = vadd.f32 %v1429, %v1537
        %v1539 = vpop.f32.mrb[0].mxu0
        %v1540 = vpop.f32.mrb[0].mxu0
        %v1541 = vadd.f32 %v1429, %v1540
        %v1542 = vpop.f32.mrb[0].mxu0
        %1543 = vmatprep.mubr.bf16.mxu0 0
        %1544 = vmatmul.mubr.bf16.gmra.mrb[0].mxu0 %v1459
        %v1545 = vpop.f32.mrb[0].mxu0
        %v1546 = vadd.f32 %v1429, %v1545
        %v1547 = vpop.f32.mrb[0].mxu0
        %v1548 = vpop.f32.mrb[0].mxu0
        %v1549 = vadd.f32 %v1429, %v1548
        %v1550 = vpop.f32.mrb[0].mxu0
        %1551 = vmatprep.mubr.bf16.mxu0 0
        %1552 = vmatmul.mubr.bf16.gmra.mrb[0].mxu0 %v1462
        %v1553 = vpop.f32.mrb[0].mxu0
        %v1554 = vadd.f32 %v1429, %v1553
        %v1555 = vpop.f32.mrb[0].mxu0
        %v1556 = vpop.f32.mrb[0].mxu0
        %v1557 = vadd.f32 %v1429, %v1556
        %v1558 = vpop.f32.mrb[0].mxu0
        %1559 = vmatprep.mubr.bf16.mxu0 0
        %1560 = vmatmul.mubr.bf16.gmra.mrb[0].mxu0 %v1465
        %v1561 = vpop.f32.mrb[0].mxu0
        %v1562 = vadd.f32 %v1429, %v1561
        %v1563 = vpop.f32.mrb[0].mxu0
        %v1564 = vpop.f32.mrb[0].mxu0
        %v1565 = vadd.f32 %v1429, %v1564
        %v1566 = vpop.f32.mrb[0].mxu0
        %1567 = vmatprep.mubr.bf16.mxu0 0
        %1568 = vmatmul.mubr.bf16.gmra.mrb[0].mxu0 %v1468
        %v1569 = vpop.f32.mrb[0].mxu0
        %v1570 = vadd.f32 %v1429, %v1569
        %v1571 = vpop.f32.mrb[0].mxu0
        %v1572 = vpop.f32.mrb[0].mxu0
        %v1573 = vadd.f32 %v1429, %v1572
        %v1574 = vpop.f32.mrb[0].mxu0
        %1575 = vmatprep.mubr.bf16.mxu0 0
        %1576 = vmatmul.mubr.bf16.gmra.mrb[0].mxu0 %v1471
        %v1577 = vpop.f32.mrb[0].mxu0
        %v1578 = vadd.f32 %v1429, %v1577
        %v1579 = vpop.f32.mrb[0].mxu0
        %v1580 = vpop.f32.mrb[0].mxu0
        %v1581 = vadd.f32 %v1429, %v1580
        %v1582 = vpop.f32.mrb[0].mxu0
        %1583 = vmatprep.mubr.bf16.mxu0 0
        %1584 = vmatmul.mubr.bf16.gmra.mrb[0].mxu0 %v1474
        %v1585 = vpop.f32.mrb[0].mxu0
        %v1586 = vadd.f32 %v1429, %v1585
        %v1587 = vpop.f32.mrb[0].mxu0
        %v1588 = vpop.f32.mrb[0].mxu0
        %v1589 = vadd.f32 %v1429, %v1588
        %v1590 = vpop.f32.mrb[0].mxu0
        %1591 = vmatprep.mubr.bf16.mxu0 0
        %1592 = vmatmul.mubr.bf16.gmra.mrb[0].mxu0 %v1477
        %v1593 = vpop.f32.mrb[0].mxu0
        %v1594 = vadd.f32 %v1429, %v1593
        %v1595 = vpop.f32.mrb[0].mxu0
        %v1596 = vpop.f32.mrb[0].mxu0
        %v1597 = vadd.f32 %v1429, %v1596
        %v1598 = vpop.f32.mrb[0].mxu0
        %1599 = vmatprep.mubr.bf16.mxu0 0
        %1600 = vmatmul.mubr.bf16.gmra.mrb[0].mxu0 %v1480
        %v1601 = vpop.f32.mrb[0].mxu0
        %v1602 = vadd.f32 %v1429, %v1601
        %v1603 = vpop.f32.mrb[0].mxu0
        %v1604 = vpop.f32.mrb[0].mxu0
        %v1605 = vadd.f32 %v1429, %v1604
        %v1606 = vpop.f32.mrb[0].mxu0
        %1607 = vmatprep.mubr.bf16.mxu0 0
        %1608 = vmatmul.mubr.bf16.gmra.mrb[0].mxu0 %v1483
        %v1609 = vpop.f32.mrb[0].mxu0
        %v1610 = vadd.f32 %v1429, %v1609
        %v1611 = vpop.f32.mrb[0].mxu0
        %v1612 = vpop.f32.mrb[0].mxu0
        %v1613 = vadd.f32 %v1429, %v1612
        %v1614 = vpop.f32.mrb[0].mxu0
        %1615 = vmatprep.mubr.bf16.mxu0 0
        %1616 = vmatmul.mubr.bf16.gmra.mrb[0].mxu0 %v1486
        %v1617 = vpop.f32.mrb[0].mxu0
        %v1618 = vadd.f32 %v1429, %v1617
        %v1619 = vpop.f32.mrb[0].mxu0
        %v1620 = vpop.f32.mrb[0].mxu0
        %v1621 = vadd.f32 %v1429, %v1620
        %v1622 = vpop.f32.mrb[0].mxu0
        %1623 = vmatprep.mubr.bf16.mxu0 0
        %1624 = vmatmul.mubr.bf16.gmra.mrb[0].mxu0 %v1489
        %v1625 = vpop.f32.mrb[0].mxu0
        %v1626 = vadd.f32 %v1429, %v1625
        %v1627 = vpop.f32.mrb[0].mxu0
        %v1628 = vpop.f32.mrb[0].mxu0
        %v1629 = vadd.f32 %v1429, %v1628
        %v1630 = vpop.f32.mrb[0].mxu0
        %1631 = vmatprep.mubr.bf16.mxu0 0
        %1632 = vmatmul.mubr.bf16.gmra.mrb[0].mxu0 %v1492
        %v1633 = vpop.f32.mrb[0].mxu0
        %v1634 = vadd.f32 %v1429, %v1633
        %v1635 = vpop.f32.mrb[0].mxu0
        %v1636 = vpop.f32.mrb[0].mxu0
        %v1637 = vadd.f32 %v1429, %v1636
        %v1638 = vpop.f32.mrb[0].mxu0
        %1639 = vmatprep.mubr.bf16.mxu0 0
        %1640 = vmatmul.mubr.bf16.gmra.mrb[0].mxu0 %v1495
        %v1641 = vpop.f32.mrb[0].mxu0
        %v1642 = vadd.f32 %v1429, %v1641
        %v1643 = vpop.f32.mrb[0].mxu0
        %v1644 = vpop.f32.mrb[0].mxu0
        %v1645 = vadd.f32 %v1429, %v1644
        %v1646 = vpop.f32.mrb[0].mxu0
        %1647 = vmatprep.mubr.bf16.mxu0 0
        %1648 = vmatmul.mubr.bf16.gmra.mrb[0].mxu0 %v1498
        %v1649 = vpop.f32.mrb[0].mxu0
        %v1650 = vadd.f32 %v1429, %v1649
        %v1651 = vpop.f32.mrb[0].mxu0
        %v1652 = vpop.f32.mrb[0].mxu0
        %v1653 = vadd.f32 %v1429, %v1652
        %v1654 = vpop.f32.mrb[0].mxu0
        %1655 = vmatprep.mubr.bf16.mxu0 0
        %1656 = vmatmul.mubr.bf16.gmra.mrb[0].mxu0 %v1501
        %v1657 = vpop.f32.mrb[0].mxu0
        %v1658 = vadd.f32 %v1429, %v1657
        %v1659 = vpop.f32.mrb[0].mxu0
        %v1660 = vpop.f32.mrb[0].mxu0
        %v1661 = vadd.f32 %v1429, %v1660
        %v1662 = vpop.f32.mrb[0].mxu0
        %1663 = vdwg.mxu0
        %v1664 = vmax.f32 %v1538, 0.0
        %v1665 = vmax.f32 %v1541, 0.0
        %v1666 = vmax.f32 %v1546, 0.0
        %v1667 = vmax.f32 %v1549, 0.0
        %v1668 = vmax.f32 %v1554, 0.0
        %v1669 = vmax.f32 %v1557, 0.0
        %v1670 = vmax.f32 %v1562, 0.0
        %v1671 = vmax.f32 %v1565, 0.0
        %v1672 = vmax.f32 %v1570, 0.0
        %v1673 = vmax.f32 %v1573, 0.0
        %v1674 = vmax.f32 %v1578, 0.0
        %v1675 = vmax.f32 %v1581, 0.0
        %v1676 = vmax.f32 %v1586, 0.0
        %v1677 = vmax.f32 %v1589, 0.0
        %v1678 = vmax.f32 %v1594, 0.0
        %v1679 = vmax.f32 %v1597, 0.0
        %v1680 = vmax.f32 %v1602, 0.0
        %v1681 = vmax.f32 %v1605, 0.0
        %v1682 = vmax.f32 %v1610, 0.0
        %v1683 = vmax.f32 %v1613, 0.0
        %v1684 = vmax.f32 %v1618, 0.0
        %v1685 = vmax.f32 %v1621, 0.0
        %v1686 = vmax.f32 %v1626, 0.0
        %v1687 = vmax.f32 %v1629, 0.0
        %v1688 = vmax.f32 %v1634, 0.0
        %v1689 = vmax.f32 %v1637, 0.0
        %v1690 = vmax.f32 %v1642, 0.0
        %v1691 = vmax.f32 %v1645, 0.0
        %v1692 = vmax.f32 %v1650, 0.0
        %v1693 = vmax.f32 %v1653, 0.0
        %v1694 = vmax.f32 %v1658, 0.0
        %v1695 = vmax.f32 %v1661, 0.0
        %v1696 = vmin.f32 %v1664, 6.0
        %v1697 = vmin.f32 %v1665, 6.0
        %v1698 = vmin.f32 %v1666, 6.0
        %v1699 = vmin.f32 %v1667, 6.0
        %v1700 = vmin.f32 %v1668, 6.0
        %v1701 = vmin.f32 %v1669, 6.0
        %v1702 = vmin.f32 %v1670, 6.0
        %v1703 = vmin.f32 %v1671, 6.0
        %v1704 = vmin.f32 %v1672, 6.0
        %v1705 = vmin.f32 %v1673, 6.0
        %v1706 = vmin.f32 %v1674, 6.0
        %v1707 = vmin.f32 %v1675, 6.0
        %v1708 = vmin.f32 %v1676, 6.0
        %v1709 = vmin.f32 %v1677, 6.0
        %v1710 = vmin.f32 %v1678, 6.0
        %v1711 = vmin.f32 %v1679, 6.0
        %v1712 = vmin.f32 %v1680, 6.0
        %v1713 = vmin.f32 %v1681, 6.0
        %v1714 = vmin.f32 %v1682, 6.0
        %v1715 = vmin.f32 %v1683, 6.0
        %v1716 = vmin.f32 %v1684, 6.0
        %v1717 = vmin.f32 %v1685, 6.0
        %v1718 = vmin.f32 %v1686, 6.0
        %v1719 = vmin.f32 %v1687, 6.0
        %v1720 = vmin.f32 %v1688, 6.0
        %v1721 = vmin.f32 %v1689, 6.0
        %v1722 = vmin.f32 %v1690, 6.0
        %v1723 = vmin.f32 %v1691, 6.0
        %v1724 = vmin.f32 %v1692, 6.0
        %v1725 = vmin.f32 %v1693, 6.0
        %v1726 = vmin.f32 %v1694, 6.0
        %v1727 = vmin.f32 %v1695, 6.0
        %1728 = vst [vmem:[%s217] sm:$0xff] %v1696
        %1729 = vst [vmem:[%s217 + $0x8] sm:$0xff] %v1697
        %1730 = vst [vmem:[%s217 + $0x10] sm:$0xff] %v1698
        %1731 = vst [vmem:[%s217 + $0x18] sm:$0xff] %v1699
        %1732 = vst [vmem:[%s217 + $0x20] sm:$0xff] %v1700
        %1733 = vst [vmem:[%s217 + $0x28] sm:$0xff] %v1701
        %1734 = vst [vmem:[%s217 + $0x30] sm:$0xff] %v1702
        %1735 = vst [vmem:[%s217 + $0x38] sm:$0xff] %v1703
        %1736 = vst [vmem:[%s217 + $0x40] sm:$0xff] %v1704
        %1737 = vst [vmem:[%s217 + $0x48] sm:$0xff] %v1705
        %1738 = vst [vmem:[%s217 + $0x50] sm:$0xff] %v1706
        %1739 = vst [vmem:[%s217 + $0x58] sm:$0xff] %v1707
        %1740 = vst [vmem:[%s217 + $0x60] sm:$0xff] %v1708
        %1741 = vst [vmem:[%s217 + $0x68] sm:$0xff] %v1709
        %1742 = vst [vmem:[%s217 + $0x70] sm:$0xff] %v1710
        %1743 = vst [vmem:[%s217 + $0x78] sm:$0xff] %v1711
        %1744 = vst [vmem:[%s217 + $0x80] sm:$0xff] %v1712
        %1745 = vst [vmem:[%s217 + $0x88] sm:$0xff] %v1713
        %1746 = vst [vmem:[%s217 + $0x90] sm:$0xff] %v1714
        %1747 = vst [vmem:[%s217 + $0x98] sm:$0xff] %v1715
        %1748 = vst [vmem:[%s217 + $0xa0] sm:$0xff] %v1716
        %1749 = vst [vmem:[%s217 + $0xa8] sm:$0xff] %v1717
        %1750 = vst [vmem:[%s217 + $0xb0] sm:$0xff] %v1718
        %1751 = vst [vmem:[%s217 + $0xb8] sm:$0xff] %v1719
        %1752 = vst [vmem:[%s217 + $0xc0] sm:$0xff] %v1720
        %1753 = vst [vmem:[%s217 + $0xc8] sm:$0xff] %v1721
        %1754 = vst [vmem:[%s217 + $0xd0] sm:$0xff] %v1722
        %1755 = vst [vmem:[%s217 + $0xd8] sm:$0xff] %v1723
        %1756 = vst [vmem:[%s217 + $0xe0] sm:$0xff] %v1724
        %1757 = vst [vmem:[%s217 + $0xe8] sm:$0xff] %v1725
        %1758 = vst [vmem:[%s217 + $0xf0] sm:$0xff] %v1726
        %1759 = vst [vmem:[%s217 + $0xf8] sm:$0xff] %v1727
        %s1760 = sand.u32 %s137, 1
        %s1761 = scalar_lea.sflag [#allocation4], %s1760
        %s1762 = sand.u32 %s137, 1
        %s1763 = smul.addr %s1762, 256
        %s1764 = scalar_lea.vmem [#allocation3], %s1763
        // Predicated region
        $region41: #{dwsep_forward.1} parent=39 // pred_check
          %p1765 = pneg %p147
        $region42: #{dwsep_forward.1} parent=39 // pred_check_branch
          %1767 = sbr.rel (%p1765) target = $region44
        $region43: #{dwsep_forward.1} parent=39 // pred_region
          %s1769 = ssub.s32 4096, 4096
          %1770 = vsyncadd %s1761, %s1769
          %s1771 = smul.addr %s19, 32
          %s1772 = smul.addr %s1771, 128
          %s1773 = scalar_lea.hbm %s5, %s1772
          %s1774 = sshll.u32 %s1764, 4
          %s1775 = int_to_ptr.vmem [resolvable:$true] %s1774
          %1780 = dma.vmem_to_hbm [thread:$0]  %s1775, 4096, %s1773, %s1761, 128, 128, 8
        $region44: #{dwsep_forward.1} parent=39 // pred_fallthru
          _
      $region40: #{dwsep_forward.1} parent=5 // pred_fallthru
        _
      %p1781 = scmp.le.s32.totalorder 2, %s14
      // Predicated region
      $region45: #{dwsep_forward.1} parent=5 // pred_check
        %p1782 = pneg %p1781
      $region46: #{dwsep_forward.1} parent=5 // pred_check_branch
        %1784 = sbr.rel (%p1782) target = $region48
      $region47: #{dwsep_forward.1} parent=5 // pred_region
        %s1785 = ssub.s32 %s14, 2
        // Predicated region
        $region49: #{dwsep_forward.1} parent=47 // pred_check
          %p1786 = pneg %p153
        $region50: #{dwsep_forward.1} parent=47 // pred_check_branch
          %1788 = sbr.rel (%p1786) target = $region52
        $region51: #{dwsep_forward.1} parent=47 // pred_region
          %s1789 = sand.u32 %s138, 1
          %s1790 = scalar_lea.sflag [#allocation4], %s1789
          %s1791 = sand.u32 %s138, 1
          %s1792 = smul.addr %s1791, 256
          %s1793 = scalar_lea.vmem [#allocation3], %s1792
          %1794 = dma.done %s1790, 4096
        $region52: #{dwsep_forward.1} parent=47 // pred_fallthru
          _
      $region48: #{dwsep_forward.1} parent=5 // pred_fallthru
        _
    $region6: #{dwsep_forward.1} parent=1 // loop_footer
      %s18 = sadd.s32 1, %s14
    $region7: #{dwsep_forward.1} parent=1 // loop_footer_branch
      %13 = sbr.rel target = $region3
    $region8: #{dwsep_forward.1} parent=1 // loop_exit
      _
    %1795 = vsyncpa [#allocation4], 1
    %s1796 = scalar_lea.sflag [#allocation4], 1
    %1797 = vsyncpa %s1796, 1

</llo_original>
